<compile_context>
chip_gen: v7x
topology: tpu7x:2x2x1
jax: 0.10.0
libtpu: 0.0.40
codegen_flags: <defaults>
</compile_context>

<pallas_src>
import functools

import jax
import jax.numpy as jnp
from jax import lax
from jax.experimental import pallas as pl
from jax.experimental.pallas import tpu as pltpu

# ----------------- problem configuration (small, consistent with the module) -----------
B = 2                      # batch
H = W = 8                  # hw_shape
N_TOK = H * W              # sequence length n = h * w = 64
C = 32                     # dim (hidden)
NUM_HEADS = 4
HEAD_DIM = C // NUM_HEADS  # 8
ROPE_BASE = 10000.0
EPS = 1e-6


# -------------------- Pallas kernel (one grid step == `bb` batch elements) --------------
def linear_attention_kernel(bb, x_ref, wqk_ref, bqk_ref, rope_ref, pswap_ref,
                            hmask_ref, scat_ref, taps_ref, o_ref):
    # x_ref:     (M, C)        M = bb * N tokens of this grid step
    # wqk_ref:   (C, 2C)       fused q|k projection weight (pre-transposed)
    # bqk_ref:   (1, 2C)       fused q|k bias
    # rope_ref:  (2, M, 2C)    [cos; sin] RoPE tables for the joint q|k channel layout
    # pswap_ref: (2C, 2C)      constant signed pair-swap permutation (precomputed)
    # hmask_ref: (C, C)        per-head block-diagonal mask (precomputed)
    # scat_ref:  (M, 9M)       hstack of the 9 depthwise-conv shift matrices (precomputed)
    # taps_ref:  (10, C)       rows 0..8 = 3x3 depthwise taps (kh*3+kw), row 9 = conv bias
    # o_ref:     (M, C)
    xb = x_ref[...]                                                   # (M, C)

    # ---- fused q|k projection: one MXU matmul, then ELU + 1 ------------------------
    qk = jnp.dot(xb, wqk_ref[...], preferred_element_type=jnp.float32) + bqk_ref[...]
    qk = jnp.where(qk > 0.0, qk, jnp.exp(jnp.minimum(qk, 0.0)) - 1.0) + 1.0

    # ---- RoPE on q|k jointly: x*cos + pair_swap(x)*sin (swap = precomputed matmul) --
    qk_sw = jnp.dot(qk, pswap_ref[...], preferred_element_type=jnp.float32)
    qk_rope = qk * rope_ref[0] + qk_sw * rope_ref[1]

    q, k = qk[:, :C], qk[:, C:]
    q_rope, k_rope = qk_rope[:, :C], qk_rope[:, C:]
    v = xb
    hmask = hmask_ref[...]

    # ---- per-batch linear attention (static slices; bb is 1 or 2, fully unrolled) ----
    outs = []
    for b in range(bb):
        s = b * N_TOK
        qb, kb = q[s:s + N_TOK], k[s:s + N_TOK]
        qrb, krb = q_rope[s:s + N_TOK], k_rope[s:s + N_TOK]
        vb = v[s:s + N_TOK]

        # z = 1 / (q . mean_n(k) + eps); hmask matmul = per-head reduce + broadcast
        km = jnp.mean(kb, axis=0, keepdims=True)                      # (1, C)
        denom = jnp.dot(qb * km, hmask, preferred_element_type=jnp.float32) + EPS
        z = pl.reciprocal(denom, approx=True)                         # (N, C), EUP slot

        # kv = k_rope^T @ v / n (block-diag per head); contract axis 0 of both (no transpose)
        kv = lax.dot_general(krb, vb, (((0,), (0,)), ((), ())),
                             preferred_element_type=jnp.float32) * (1.0 / N_TOK)
        kv = kv * hmask                                               # (C, C)
        outs.append(jnp.dot(qrb, kv, preferred_element_type=jnp.float32) * z)
    attn = outs[0] if bb == 1 else jnp.concatenate(outs, axis=0)      # (M, C)

    # ---- LePE: depthwise 3x3 conv (padding=1) as ONE fused matmul --------------------
    # V9[t*M + j, c] = v[j, c] * tap_t[c];  lepe = S_cat @ V9 = sum_t (S_t @ v) * tap_t
    v9 = jnp.concatenate([v * taps_ref[t:t + 1, :] for t in range(9)], axis=0)  # (9M, C)
    lepe = jnp.dot(scat_ref[...], v9, preferred_element_type=jnp.float32)       # (M, C)

    o_ref[...] = attn + lepe + taps_ref[9:10, :]                      # add depthwise conv bias


# -------------------- host-side constant prep (constant-folded under jit) ---------------
def _rope_tables(bb):
    """cos/sin tables for the joint (q|k) channel layout, tiled for bb batches: (2, bb*N, 2C)."""
    k_max = C // 4
    theta = 1.0 / (ROPE_BASE ** (jnp.arange(k_max, dtype=jnp.float32) / k_max))
    yy, xx = jnp.meshgrid(jnp.arange(H, dtype=jnp.float32),
                          jnp.arange(W, dtype=jnp.float32), indexing="ij")
    angles = jnp.concatenate([yy[..., None] * theta, xx[..., None] * theta],
                             axis=-1).reshape(N_TOK, C // 2)
    cos = jnp.repeat(jnp.cos(angles), 2, axis=-1)        # channels (2m, 2m+1) share angle m
    sin = jnp.repeat(jnp.sin(angles), 2, axis=-1)
    cos2 = jnp.concatenate([cos, cos], axis=-1)          # same table for q half and k half
    sin2 = jnp.concatenate([sin, sin], axis=-1)
    tab = jnp.stack([cos2, sin2], axis=0)                # (2, N, 2C)
    return jnp.tile(tab, (1, bb, 1))                     # (2, bb*N, 2C)


def _pair_swap():
    """(2C, 2C) signed permutation: (x @ P)[2m] = -x[2m+1], (x @ P)[2m+1] = +x[2m]."""
    r = jnp.arange(2 * C)
    sign = jnp.where(r % 2 == 0, 1.0, -1.0).astype(jnp.float32)
    return jnp.where((r[:, None] ^ 1) == r[None, :], sign[:, None], 0.0)


def _head_mask():
    """(C, C) block-diagonal mask: 1 where row/col channels belong to the same head."""
    r = jnp.arange(C)
    return ((r[:, None] // HEAD_DIM) == (r[None, :] // HEAD_DIM)).astype(jnp.float32)


def _lepe_shift_cat(bb):
    """hstack of the 9 (M, M) shift matrices (M = bb*N) for a padded 3x3 depthwise conv."""
    m = bb * N_TOK
    idx = jnp.arange(m)
    nn = idx % N_TOK
    yy = nn // W
    xx = nn % W
    cols = jnp.arange(m)
    blocks = []
    for kh in range(3):
        for kw in range(3):
            dh, dw = kh - 1, kw - 1
            valid = (yy + dh >= 0) & (yy + dh < H) & (xx + dw >= 0) & (xx + dw < W)
            src = idx + dh * W + dw        # stays inside the batch block whenever valid
            s_t = ((cols[None, :] == src[:, None]) & valid[:, None]).astype(jnp.float32)
            blocks.append(s_t)
    return jnp.concatenate(blocks, axis=1)               # (M, 9M)


@functools.partial(jax.jit, static_argnames=("bb",))
def _linear_attention_impl(x, wqk, bqk, lepe_w, lepe_b, *, bb):
    """Matches PyTorch LinearAttention.forward(x, hw_shape=(H, W)). x: (B, N, C)."""
    m = bb * N_TOK
    x2d = x.reshape(B * N_TOK, C)                        # token matrix (no transpose)
    wqk_t = jnp.transpose(wqk)                           # (C, 2C)   parameter prep only
    bqk2 = bqk.reshape(1, 2 * C)
    rope_tab = _rope_tables(bb)                          # (2, M, 2C)
    pswap = _pair_swap()                                 # (2C, 2C)
    hmask = _head_mask()                                 # (C, C)
    scat = _lepe_shift_cat(bb)                           # (M, 9M)
    taps = jnp.concatenate([lepe_w.reshape(C, 9).T, lepe_b.reshape(1, C)], axis=0)  # (10, C)

    grid_spec = pltpu.PrefetchScalarGridSpec(
        num_scalar_prefetch=0,
        grid=(B // bb,),
        in_specs=[
            pl.BlockSpec((m, C), lambda i: (i, 0)),            # this step's tokens
            pl.BlockSpec((C, 2 * C), lambda i: (0, 0)),        # shared qk weight
            pl.BlockSpec((1, 2 * C), lambda i: (0, 0)),        # shared qk bias
            pl.BlockSpec((2, m, 2 * C), lambda i: (0, 0, 0)),  # shared RoPE tables
            pl.BlockSpec((2 * C, 2 * C), lambda i: (0, 0)),    # pair-swap permutation
            pl.BlockSpec((C, C), lambda i: (0, 0)),            # head mask
            pl.BlockSpec((m, 9 * m), lambda i: (0, 0)),        # fused LePE shift matrix
            pl.BlockSpec((10, C), lambda i: (0, 0)),           # LePE taps + bias
        ],
        out_specs=pl.BlockSpec((m, C), lambda i: (i, 0)),
    )
    out2d = pl.pallas_call(
        functools.partial(linear_attention_kernel, bb),
        out_shape=jax.ShapeDtypeStruct((B * N_TOK, C), jnp.float32),
        grid_spec=grid_spec,
        compiler_params=pltpu.CompilerParams(
            dimension_semantics=("parallel",)),          # batch axis -> both TCs on v7x
    )(x2d, wqk_t, bqk2, rope_tab, pswap, hmask, scat, taps)
    return out2d.reshape(B, N_TOK, C)


def _batch_chunk():
    """v7x (2 TensorCores): 1 batch per grid step; v5e/v6e (1 TC): collapse grid to one step."""
    try:
        kind = jax.devices()[0].device_kind.lower()
        if "v7" in kind or "7x" in kind:
            return 1
    except Exception:
        pass
    return B


def linear_attention_forward(x, wqk, bqk, lepe_w, lepe_b):
    return _linear_attention_impl(x, wqk, bqk, lepe_w, lepe_b, bb=_batch_chunk())


# -------------------- pure-JAX reference (faithful port of the PyTorch module) ----------
def _rope_reference(x, shape, base=ROPE_BASE):
    channel_dims, feature_dim = shape[:-1], shape[-1]
    k_max = feature_dim // (2 * len(channel_dims))
    theta_ks = 1.0 / (base ** (jnp.arange(k_max, dtype=jnp.float32) / k_max))
    grids = jnp.meshgrid(*[jnp.arange(d, dtype=jnp.float32) for d in channel_dims],
                         indexing="ij")
    angles = jnp.concatenate([g[..., None] * theta_ks for g in grids], axis=-1)
    rot_re = jnp.cos(angles)[..., None]
    rot_im = jnp.sin(angles)[..., None]
    xr = x.reshape(x.shape[:-1] + (-1, 2))
    x_re, x_im = xr[..., :1], xr[..., 1:]
    pe = jnp.concatenate([x_re * rot_re - x_im * rot_im,
                          x_im * rot_re + x_re * rot_im], axis=-1)
    return pe.reshape(x.shape)


def reference_forward(x, wqk, bqk, lepe_w, lepe_b):
    b, n, c = x.shape
    h, w = H, W
    nh, hd = NUM_HEADS, HEAD_DIM
    qk = jnp.einsum("bnc,dc->bnd", x, wqk) + bqk          # nn.Linear: x @ W^T + b
    q, k = qk[..., :c], qk[..., c:]
    q = jax.nn.elu(q) + 1.0
    k = jax.nn.elu(k) + 1.0
    v = x
    q_rope = jnp.transpose(_rope_reference(q.reshape(b, h, w, c), (h, w, c))
                           .reshape(b, n, nh, hd), (0, 2, 1, 3))
    k_rope = jnp.transpose(_rope_reference(k.reshape(b, h, w, c), (h, w, c))
                           .reshape(b, n, nh, hd), (0, 2, 1, 3))
    q_h = jnp.transpose(q.reshape(b, n, nh, hd), (0, 2, 1, 3))
    k_h = jnp.transpose(k.reshape(b, n, nh, hd), (0, 2, 1, 3))
    v_h = jnp.transpose(v.reshape(b, n, nh, hd), (0, 2, 1, 3))
    z = 1.0 / (q_h @ jnp.swapaxes(k_h.mean(axis=-2, keepdims=True), -2, -1) + EPS)
    kv = (jnp.swapaxes(k_rope, -2, -1) * n ** -0.5) @ (v_h * n ** -0.5)
    out = (q_rope @ kv) * z
    out = jnp.swapaxes(out, 1, 2).reshape(b, n, c)
    v_img = jnp.transpose(v.reshape(b, h, w, c), (0, 3, 1, 2))        # (b, c, h, w)
    lepe = jax.lax.conv_general_dilated(
        v_img, lepe_w, window_strides=(1, 1), padding=[(1, 1), (1, 1)],
        dimension_numbers=("NCHW", "OIHW", "NCHW"), feature_group_count=c)
    lepe = lepe + lepe_b.reshape(1, c, 1, 1)
    lepe = jnp.transpose(lepe, (0, 2, 3, 1)).reshape(b, n, c)
    return out + lepe


if __name__ == "__main__":
    key = jax.random.PRNGKey(0)
    kx, kw_, kb_, klw, klb = jax.random.split(key, 5)

    # deterministic synthetic params (shapes follow LinearAttention(dim=32, num_heads=4))
    x = jax.random.normal(kx, (B, N_TOK, C), jnp.float32)             # (B, N, C)
    wqk = jax.random.normal(kw_, (2 * C, C), jnp.float32) * 0.1       # nn.Linear(dim, 2*dim)
    bqk = jax.random.normal(kb_, (2 * C,), jnp.float32) * 0.1
    lepe_w = jax.random.normal(klw, (C, 1, 3, 3), jnp.float32) * 0.2  # depthwise Conv2d weight
    lepe_b = jax.random.normal(klb, (C,), jnp.float32) * 0.1          # depthwise Conv2d bias

    out = linear_attention_forward(x, wqk, bqk, lepe_w, lepe_b)
    out = jax.block_until_ready(out)

    ref = reference_forward(x, wqk, bqk, lepe_w, lepe_b)
    assert out.shape == (B, N_TOK, C)
    assert jnp.allclose(out, ref, rtol=2e-2, atol=2e-2), float(jnp.max(jnp.abs(out - ref)))

    print("KERNEL_OK")
</pallas_src>

<mosaic_0001>
module attributes {stable_mosaic.version = 11 : i64} {
  func.func @linear_attention_kernel(%arg0: i32, %arg1: memref<128x32xf32, #tpu.memory_space<vmem>>, %arg2: memref<32x64xf32, #tpu.memory_space<vmem>>, %arg3: memref<1x64xf32, #tpu.memory_space<vmem>>, %arg4: memref<2x128x64xf32, #tpu.memory_space<vmem>>, %arg5: memref<64x64xf32, #tpu.memory_space<vmem>>, %arg6: memref<32x32xf32, #tpu.memory_space<vmem>>, %arg7: memref<128x1152xf32, #tpu.memory_space<vmem>>, %arg8: memref<10x32xf32, #tpu.memory_space<vmem>>, %arg9: memref<128x32xf32, #tpu.memory_space<vmem>>) attributes {dimension_semantics = [#tpu.dimension_semantics<parallel>], iteration_bounds = array<i64: 1>, scalar_prefetch = 0 : i64, scratch_operands = 0 : i64, tpu.core_type = #tpu.core_type<tc>, window_params = [{transform_indices = @transform_0, window_bounds = array<i64: 128, 32>}, {pipeline_mode = #tpu.pipeline_mode<synchronous>, transform_indices = @transform_1, window_bounds = array<i64: 32, 64>}, {pipeline_mode = #tpu.pipeline_mode<synchronous>, transform_indices = @transform_2, window_bounds = array<i64: 1, 64>}, {pipeline_mode = #tpu.pipeline_mode<synchronous>, transform_indices = @transform_3, window_bounds = array<i64: 2, 128, 64>}, {pipeline_mode = #tpu.pipeline_mode<synchronous>, transform_indices = @transform_4, window_bounds = array<i64: 64, 64>}, {pipeline_mode = #tpu.pipeline_mode<synchronous>, transform_indices = @transform_5, window_bounds = array<i64: 32, 32>}, {pipeline_mode = #tpu.pipeline_mode<synchronous>, transform_indices = @transform_6, window_bounds = array<i64: 128, 1152>}, {pipeline_mode = #tpu.pipeline_mode<synchronous>, transform_indices = @transform_7, window_bounds = array<i64: 10, 32>}, {transform_indices = @transform_8, window_bounds = array<i64: 128, 32>}]} {
    %c0 = arith.constant 0 : index
    %c0_0 = arith.constant 0 : index
    %0 = vector.load %arg1[%c0, %c0_0] : memref<128x32xf32, #tpu.memory_space<vmem>>, vector<128x32xf32>
    %c0_1 = arith.constant 0 : index
    %c0_2 = arith.constant 0 : index
    %1 = vector.load %arg2[%c0_1, %c0_2] : memref<32x64xf32, #tpu.memory_space<vmem>>, vector<32x64xf32>
    %cst = arith.constant dense<0.000000e+00> : vector<128x64xf32>
    %2 = tpu.matmul %0, %1, %cst {dimension_numbers = #tpu.dot_dimension_numbers<[1], [0], [0], [1], [0, 0, 1, 1], [], []>} : vector<128x32xf32>, vector<32x64xf32>, vector<128x64xf32> -> vector<128x64xf32>
    %c0_3 = arith.constant 0 : index
    %c0_4 = arith.constant 0 : index
    %3 = vector.load %arg3[%c0_3, %c0_4] : memref<1x64xf32, #tpu.memory_space<vmem>>, vector<1x64xf32>
    %4 = vector.broadcast %3 : vector<1x64xf32> to vector<128x64xf32>
    %5 = arith.addf %2, %4 : vector<128x64xf32>
    %cst_5 = arith.constant 0.000000e+00 : f32
    %6 = vector.broadcast %cst_5 : f32 to vector<128x64xf32>
    %7 = arith.cmpf ogt, %5, %6 : vector<128x64xf32>
    %cst_6 = arith.constant 0.000000e+00 : f32
    %8 = vector.broadcast %cst_6 : f32 to vector<128x64xf32>
    %9 = arith.minimumf %5, %8 : vector<128x64xf32>
    %10 = math.exp %9 : vector<128x64xf32>
    %cst_7 = arith.constant 1.000000e+00 : f32
    %11 = vector.broadcast %cst_7 : f32 to vector<128x64xf32>
    %12 = arith.subf %10, %11 : vector<128x64xf32>
    %13 = arith.select %7, %5, %12 : vector<128x64xi1>, vector<128x64xf32>
    %cst_8 = arith.constant 1.000000e+00 : f32
    %14 = vector.broadcast %cst_8 : f32 to vector<128x64xf32>
    %15 = arith.addf %13, %14 : vector<128x64xf32>
    %c0_9 = arith.constant 0 : index
    %c0_10 = arith.constant 0 : index
    %16 = vector.load %arg5[%c0_9, %c0_10] : memref<64x64xf32, #tpu.memory_space<vmem>>, vector<64x64xf32>
    %cst_11 = arith.constant dense<0.000000e+00> : vector<128x64xf32>
    %17 = tpu.matmul %15, %16, %cst_11 {dimension_numbers = #tpu.dot_dimension_numbers<[1], [0], [0], [1], [0, 0, 1, 1], [], []>} : vector<128x64xf32>, vector<64x64xf32>, vector<128x64xf32> -> vector<128x64xf32>
    %c0_12 = arith.constant 0 : index
    %c0_13 = arith.constant 0 : index
    %c0_14 = arith.constant 0 : index
    %18 = vector.load %arg4[%c0_12, %c0_13, %c0_14] : memref<2x128x64xf32, #tpu.memory_space<vmem>>, vector<1x128x64xf32>
    %19 = vector.shape_cast %18 : vector<1x128x64xf32> to vector<128x64xf32>
    %20 = arith.mulf %15, %19 : vector<128x64xf32>
    %c1 = arith.constant 1 : index
    %c0_15 = arith.constant 0 : index
    %c0_16 = arith.constant 0 : index
    %21 = vector.load %arg4[%c1, %c0_15, %c0_16] : memref<2x128x64xf32, #tpu.memory_space<vmem>>, vector<1x128x64xf32>
    %22 = vector.shape_cast %21 : vector<1x128x64xf32> to vector<128x64xf32>
    %23 = arith.mulf %17, %22 : vector<128x64xf32>
    %24 = arith.addf %20, %23 : vector<128x64xf32>
    %25 = vector.extract_strided_slice %15 {offsets = [0, 0], sizes = [128, 32], strides = [1, 1]} : vector<128x64xf32> to vector<128x32xf32>
    %26 = vector.extract_strided_slice %15 {offsets = [0, 32], sizes = [128, 32], strides = [1, 1]} : vector<128x64xf32> to vector<128x32xf32>
    %27 = vector.extract_strided_slice %24 {offsets = [0, 0], sizes = [128, 32], strides = [1, 1]} : vector<128x64xf32> to vector<128x32xf32>
    %28 = vector.extract_strided_slice %24 {offsets = [0, 32], sizes = [128, 32], strides = [1, 1]} : vector<128x64xf32> to vector<128x32xf32>
    %c0_17 = arith.constant 0 : index
    %c0_18 = arith.constant 0 : index
    %29 = vector.load %arg6[%c0_17, %c0_18] : memref<32x32xf32, #tpu.memory_space<vmem>>, vector<32x32xf32>
    %30 = vector.extract_strided_slice %25 {offsets = [0, 0], sizes = [64, 32], strides = [1, 1]} : vector<128x32xf32> to vector<64x32xf32>
    %31 = vector.extract_strided_slice %26 {offsets = [0, 0], sizes = [64, 32], strides = [1, 1]} : vector<128x32xf32> to vector<64x32xf32>
    %32 = vector.extract_strided_slice %27 {offsets = [0, 0], sizes = [64, 32], strides = [1, 1]} : vector<128x32xf32> to vector<64x32xf32>
    %33 = vector.extract_strided_slice %28 {offsets = [0, 0], sizes = [64, 32], strides = [1, 1]} : vector<128x32xf32> to vector<64x32xf32>
    %34 = vector.extract_strided_slice %0 {offsets = [0, 0], sizes = [64, 32], strides = [1, 1]} : vector<128x32xf32> to vector<64x32xf32>
    %cst_19 = arith.constant dense<0.000000e+00> : vector<32xf32>
    %35 = vector.multi_reduction <add>, %31, %cst_19 [0] : vector<64x32xf32> to vector<32xf32>
    %36 = vector.shape_cast %35 : vector<32xf32> to vector<1x32xf32>
    %cst_20 = arith.constant 6.400000e+01 : f32
    %37 = vector.broadcast %cst_20 : f32 to vector<1x32xf32>
    %38 = arith.divf %36, %37 : vector<1x32xf32>
    %39 = vector.broadcast %38 : vector<1x32xf32> to vector<64x32xf32>
    %40 = arith.mulf %30, %39 : vector<64x32xf32>
    %cst_21 = arith.constant dense<0.000000e+00> : vector<64x32xf32>
    %41 = tpu.matmul %40, %29, %cst_21 {dimension_numbers = #tpu.dot_dimension_numbers<[1], [0], [0], [1], [0, 0, 1, 1], [], []>} : vector<64x32xf32>, vector<32x32xf32>, vector<64x32xf32> -> vector<64x32xf32>
    %cst_22 = arith.constant 9.99999997E-7 : f32
    %42 = vector.broadcast %cst_22 : f32 to vector<64x32xf32>
    %43 = arith.addf %41, %42 : vector<64x32xf32>
    %44 = tpu.reciprocal %43 {approx = true} : vector<64x32xf32> -> vector<64x32xf32>
    %cst_23 = arith.constant dense<0.000000e+00> : vector<32x32xf32>
    %45 = tpu.matmul %33, %34, %cst_23 {dimension_numbers = #tpu.dot_dimension_numbers<[0], [0], [1], [1], [0, 1, 1, 1], [], []>} : vector<64x32xf32>, vector<64x32xf32>, vector<32x32xf32> -> vector<32x32xf32>
    %cst_24 = arith.constant 1.562500e-02 : f32
    %46 = vector.broadcast %cst_24 : f32 to vector<32x32xf32>
    %47 = arith.mulf %45, %46 : vector<32x32xf32>
    %48 = arith.mulf %47, %29 : vector<32x32xf32>
    %cst_25 = arith.constant dense<0.000000e+00> : vector<64x32xf32>
    %49 = tpu.matmul %32, %48, %cst_25 {dimension_numbers = #tpu.dot_dimension_numbers<[1], [0], [0], [1], [0, 0, 1, 1], [], []>} : vector<64x32xf32>, vector<32x32xf32>, vector<64x32xf32> -> vector<64x32xf32>
    %50 = arith.mulf %49, %44 : vector<64x32xf32>
    %51 = vector.extract_strided_slice %25 {offsets = [64, 0], sizes = [64, 32], strides = [1, 1]} : vector<128x32xf32> to vector<64x32xf32>
    %52 = vector.extract_strided_slice %26 {offsets = [64, 0], sizes = [64, 32], strides = [1, 1]} : vector<128x32xf32> to vector<64x32xf32>
    %53 = vector.extract_strided_slice %27 {offsets = [64, 0], sizes = [64, 32], strides = [1, 1]} : vector<128x32xf32> to vector<64x32xf32>
    %54 = vector.extract_strided_slice %28 {offsets = [64, 0], sizes = [64, 32], strides = [1, 1]} : vector<128x32xf32> to vector<64x32xf32>
    %55 = vector.extract_strided_slice %0 {offsets = [64, 0], sizes = [64, 32], strides = [1, 1]} : vector<128x32xf32> to vector<64x32xf32>
    %cst_26 = arith.constant dense<0.000000e+00> : vector<32xf32>
    %56 = vector.multi_reduction <add>, %52, %cst_26 [0] : vector<64x32xf32> to vector<32xf32>
    %57 = vector.shape_cast %56 : vector<32xf32> to vector<1x32xf32>
    %cst_27 = arith.constant 6.400000e+01 : f32
    %58 = vector.broadcast %cst_27 : f32 to vector<1x32xf32>
    %59 = arith.divf %57, %58 : vector<1x32xf32>
    %60 = vector.broadcast %59 : vector<1x32xf32> to vector<64x32xf32>
    %61 = arith.mulf %51, %60 : vector<64x32xf32>
    %cst_28 = arith.constant dense<0.000000e+00> : vector<64x32xf32>
    %62 = tpu.matmul %61, %29, %cst_28 {dimension_numbers = #tpu.dot_dimension_numbers<[1], [0], [0], [1], [0, 0, 1, 1], [], []>} : vector<64x32xf32>, vector<32x32xf32>, vector<64x32xf32> -> vector<64x32xf32>
    %cst_29 = arith.constant 9.99999997E-7 : f32
    %63 = vector.broadcast %cst_29 : f32 to vector<64x32xf32>
    %64 = arith.addf %62, %63 : vector<64x32xf32>
    %65 = tpu.reciprocal %64 {approx = true} : vector<64x32xf32> -> vector<64x32xf32>
    %cst_30 = arith.constant dense<0.000000e+00> : vector<32x32xf32>
    %66 = tpu.matmul %54, %55, %cst_30 {dimension_numbers = #tpu.dot_dimension_numbers<[0], [0], [1], [1], [0, 1, 1, 1], [], []>} : vector<64x32xf32>, vector<64x32xf32>, vector<32x32xf32> -> vector<32x32xf32>
    %cst_31 = arith.constant 1.562500e-02 : f32
    %67 = vector.broadcast %cst_31 : f32 to vector<32x32xf32>
    %68 = arith.mulf %66, %67 : vector<32x32xf32>
    %69 = arith.mulf %68, %29 : vector<32x32xf32>
    %cst_32 = arith.constant dense<0.000000e+00> : vector<64x32xf32>
    %70 = tpu.matmul %53, %69, %cst_32 {dimension_numbers = #tpu.dot_dimension_numbers<[1], [0], [0], [1], [0, 0, 1, 1], [], []>} : vector<64x32xf32>, vector<32x32xf32>, vector<64x32xf32> -> vector<64x32xf32>
    %71 = arith.mulf %70, %65 : vector<64x32xf32>
    %72 = tpu.concatenate %50, %71 in 0 : vector<64x32xf32>, vector<64x32xf32> -> vector<128x32xf32>
    %c0_33 = arith.constant 0 : index
    %c0_34 = arith.constant 0 : index
    %73 = vector.load %arg8[%c0_33, %c0_34] : memref<10x32xf32, #tpu.memory_space<vmem>>, vector<1x32xf32>
    %74 = vector.broadcast %73 : vector<1x32xf32> to vector<128x32xf32>
    %75 = arith.mulf %0, %74 : vector<128x32xf32>
    %c1_35 = arith.constant 1 : index
    %c0_36 = arith.constant 0 : index
    %76 = vector.load %arg8[%c1_35, %c0_36] : memref<10x32xf32, #tpu.memory_space<vmem>>, vector<1x32xf32>
    %77 = vector.broadcast %76 : vector<1x32xf32> to vector<128x32xf32>
    %78 = arith.mulf %0, %77 : vector<128x32xf32>
    %c2 = arith.constant 2 : index
    %c0_37 = arith.constant 0 : index
    %79 = vector.load %arg8[%c2, %c0_37] : memref<10x32xf32, #tpu.memory_space<vmem>>, vector<1x32xf32>
    %80 = vector.broadcast %79 : vector<1x32xf32> to vector<128x32xf32>
    %81 = arith.mulf %0, %80 : vector<128x32xf32>
    %c3 = arith.constant 3 : index
    %c0_38 = arith.constant 0 : index
    %82 = vector.load %arg8[%c3, %c0_38] : memref<10x32xf32, #tpu.memory_space<vmem>>, vector<1x32xf32>
    %83 = vector.broadcast %82 : vector<1x32xf32> to vector<128x32xf32>
    %84 = arith.mulf %0, %83 : vector<128x32xf32>
    %c4 = arith.constant 4 : index
    %c0_39 = arith.constant 0 : index
    %85 = vector.load %arg8[%c4, %c0_39] : memref<10x32xf32, #tpu.memory_space<vmem>>, vector<1x32xf32>
    %86 = vector.broadcast %85 : vector<1x32xf32> to vector<128x32xf32>
    %87 = arith.mulf %0, %86 : vector<128x32xf32>
    %c5 = arith.constant 5 : index
    %c0_40 = arith.constant 0 : index
    %88 = vector.load %arg8[%c5, %c0_40] : memref<10x32xf32, #tpu.memory_space<vmem>>, vector<1x32xf32>
    %89 = vector.broadcast %88 : vector<1x32xf32> to vector<128x32xf32>
    %90 = arith.mulf %0, %89 : vector<128x32xf32>
    %c6 = arith.constant 6 : index
    %c0_41 = arith.constant 0 : index
    %91 = vector.load %arg8[%c6, %c0_41] : memref<10x32xf32, #tpu.memory_space<vmem>>, vector<1x32xf32>
    %92 = vector.broadcast %91 : vector<1x32xf32> to vector<128x32xf32>
    %93 = arith.mulf %0, %92 : vector<128x32xf32>
    %c7 = arith.constant 7 : index
    %c0_42 = arith.constant 0 : index
    %94 = vector.load %arg8[%c7, %c0_42] : memref<10x32xf32, #tpu.memory_space<vmem>>, vector<1x32xf32>
    %95 = vector.broadcast %94 : vector<1x32xf32> to vector<128x32xf32>
    %96 = arith.mulf %0, %95 : vector<128x32xf32>
    %c8 = arith.constant 8 : index
    %c0_43 = arith.constant 0 : index
    %97 = vector.load %arg8[%c8, %c0_43] : memref<10x32xf32, #tpu.memory_space<vmem>>, vector<1x32xf32>
    %98 = vector.broadcast %97 : vector<1x32xf32> to vector<128x32xf32>
    %99 = arith.mulf %0, %98 : vector<128x32xf32>
    %100 = tpu.concatenate %75, %78, %81, %84, %87, %90, %93, %96, %99 in 0 : vector<128x32xf32>, vector<128x32xf32>, vector<128x32xf32>, vector<128x32xf32>, vector<128x32xf32>, vector<128x32xf32>, vector<128x32xf32>, vector<128x32xf32>, vector<128x32xf32> -> vector<1152x32xf32>
    %c0_44 = arith.constant 0 : index
    %c0_45 = arith.constant 0 : index
    %101 = vector.load %arg7[%c0_44, %c0_45] : memref<128x1152xf32, #tpu.memory_space<vmem>>, vector<128x1152xf32>
    %cst_46 = arith.constant dense<0.000000e+00> : vector<128x32xf32>
    %102 = tpu.matmul %101, %100, %cst_46 {dimension_numbers = #tpu.dot_dimension_numbers<[1], [0], [0], [1], [0, 0, 1, 1], [], []>} : vector<128x1152xf32>, vector<1152x32xf32>, vector<128x32xf32> -> vector<128x32xf32>
    %103 = arith.addf %72, %102 : vector<128x32xf32>
    %c9 = arith.constant 9 : index
    %c0_47 = arith.constant 0 : index
    %104 = vector.load %arg8[%c9, %c0_47] : memref<10x32xf32, #tpu.memory_space<vmem>>, vector<1x32xf32>
    %105 = vector.broadcast %104 : vector<1x32xf32> to vector<128x32xf32>
    %106 = arith.addf %103, %105 : vector<128x32xf32>
    %c0_48 = arith.constant 0 : index
    %c0_49 = arith.constant 0 : index
    %107 = vector.load %arg9[%c0_48, %c0_49] : memref<128x32xf32, #tpu.memory_space<vmem>>, vector<128x32xf32>
    tpu.vector_store %arg9[%c0_48, %c0_49], %106 {strides = array<i32>} : memref<128x32xf32, #tpu.memory_space<vmem>>, vector<128x32xf32>,
    return
  }
  func.func @transform_0(%arg0: i32) -> (i32, i32) {
    %c0_i32 = arith.constant 0 : i32
    %c0_i32_0 = arith.constant 0 : i32
    return %arg0, %c0_i32 : i32, i32
  }
  func.func @transform_1(%arg0: i32) -> (i32, i32) {
    %c0_i32 = arith.constant 0 : i32
    %c0_i32_0 = arith.constant 0 : i32
    %c0_i32_1 = arith.constant 0 : i32
    return %c0_i32, %c0_i32_0 : i32, i32
  }
  func.func @transform_2(%arg0: i32) -> (i32, i32) {
    %c0_i32 = arith.constant 0 : i32
    %c0_i32_0 = arith.constant 0 : i32
    %c0_i32_1 = arith.constant 0 : i32
    return %c0_i32, %c0_i32_0 : i32, i32
  }
  func.func @transform_3(%arg0: i32) -> (i32, i32, i32) {
    %c0_i32 = arith.constant 0 : i32
    %c0_i32_0 = arith.constant 0 : i32
    %c0_i32_1 = arith.constant 0 : i32
    %c0_i32_2 = arith.constant 0 : i32
    return %c0_i32, %c0_i32_0, %c0_i32_1 : i32, i32, i32
  }
  func.func @transform_4(%arg0: i32) -> (i32, i32) {
    %c0_i32 = arith.constant 0 : i32
    %c0_i32_0 = arith.constant 0 : i32
    %c0_i32_1 = arith.constant 0 : i32
    return %c0_i32, %c0_i32_0 : i32, i32
  }
  func.func @transform_5(%arg0: i32) -> (i32, i32) {
    %c0_i32 = arith.constant 0 : i32
    %c0_i32_0 = arith.constant 0 : i32
    %c0_i32_1 = arith.constant 0 : i32
    return %c0_i32, %c0_i32_0 : i32, i32
  }
  func.func @transform_6(%arg0: i32) -> (i32, i32) {
    %c0_i32 = arith.constant 0 : i32
    %c0_i32_0 = arith.constant 0 : i32
    %c0_i32_1 = arith.constant 0 : i32
    return %c0_i32, %c0_i32_0 : i32, i32
  }
  func.func @transform_7(%arg0: i32) -> (i32, i32) {
    %c0_i32 = arith.constant 0 : i32
    %c0_i32_0 = arith.constant 0 : i32
    %c0_i32_1 = arith.constant 0 : i32
    return %c0_i32, %c0_i32_0 : i32, i32
  }
  func.func @transform_8(%arg0: i32) -> (i32, i32) {
    %c0_i32 = arith.constant 0 : i32
    %c0_i32_0 = arith.constant 0 : i32
    return %arg0, %c0_i32 : i32, i32
  }
}

</mosaic_0001>

<llo_original>
// kernel: _linear_attention_impl.1
$region0: #{_linear_attention_impl.1}
  #allocation0 [shape = 'u32[]', space=smem, size = 0x4, offset = 0x4, fixed_abs, tag = 'smem constant byte address 0x4 - core index']
  #allocation1 [shape = 'u32[144,128]{1,0:T(1,128)}', space=vmem, size = 0x12000, scoped, tag = 'internal scratch']
  %s0 = inlined_call_operand.vmem [shape: f32[128,32], index: 0, kind: input, shape index: {}]
  %s1 = inlined_call_operand.vmem [shape: f32[32,64], index: 1, kind: input, shape index: {}]
  %s2 = inlined_call_operand.vmem [shape: f32[1,64], index: 2, kind: input, shape index: {}]
  %s3 = inlined_call_operand.vmem [shape: f32[2,128,64], index: 3, kind: input, shape index: {}]
  %s4 = inlined_call_operand.vmem [shape: f32[64,64], index: 4, kind: input, shape index: {}]
  %s5 = inlined_call_operand.vmem [shape: f32[32,32], index: 5, kind: input, shape index: {}]
  %s6 = inlined_call_operand.vmem [shape: f32[128,1152], index: 6, kind: input, shape index: {}]
  %s7 = inlined_call_operand.vmem [shape: f32[10,32], index: 7, kind: input, shape index: {}]
  %s8 = inlined_call_operand.vmem [shape: f32[128,32], index: 8, kind: output, shape index: {}]
  %s9 = sld [smem:[#allocation0]]
  $region42: #{_linear_attention_impl.1} parent=0
    _
  %s11 = ssub.s32 1, %s9
  %s12 = scalar_select 0, %s11, %s9
  // Predicated region
  $region2: #{_linear_attention_impl.1} parent=0 // pred_check
    _
  $region3: #{_linear_attention_impl.1} parent=0 // pred_check_branch
    %14 = sbr.rel (0) target = $region5
  $region4: #{_linear_attention_impl.1} parent=0 // pred_region
    _
  $region5: #{_linear_attention_impl.1} parent=0 // pred_fallthru
    _
  // Predicated region
  $region6: #{_linear_attention_impl.1} parent=0 // pred_check
    _
  $region7: #{_linear_attention_impl.1} parent=0 // pred_check_branch
    %16 = sbr.rel (0) target = $region9
  $region8: #{_linear_attention_impl.1} parent=0 // pred_region
    _
  $region9: #{_linear_attention_impl.1} parent=0 // pred_fallthru
    _
  // Predicated region
  $region10: #{_linear_attention_impl.1} parent=0 // pred_check
    _
  $region11: #{_linear_attention_impl.1} parent=0 // pred_check_branch
    %18 = sbr.rel (0) target = $region13
  $region12: #{_linear_attention_impl.1} parent=0 // pred_region
    _
  $region13: #{_linear_attention_impl.1} parent=0 // pred_fallthru
    _
  // Predicated region
  $region14: #{_linear_attention_impl.1} parent=0 // pred_check
    _
  $region15: #{_linear_attention_impl.1} parent=0 // pred_check_branch
    %20 = sbr.rel (0) target = $region17
  $region16: #{_linear_attention_impl.1} parent=0 // pred_region
    _
  $region17: #{_linear_attention_impl.1} parent=0 // pred_fallthru
    _
  // Predicated region
  $region18: #{_linear_attention_impl.1} parent=0 // pred_check
    _
  $region19: #{_linear_attention_impl.1} parent=0 // pred_check_branch
    %22 = sbr.rel (0) target = $region21
  $region20: #{_linear_attention_impl.1} parent=0 // pred_region
    _
  $region21: #{_linear_attention_impl.1} parent=0 // pred_fallthru
    _
  // Predicated region
  $region22: #{_linear_attention_impl.1} parent=0 // pred_check
    _
  $region23: #{_linear_attention_impl.1} parent=0 // pred_check_branch
    %24 = sbr.rel (0) target = $region25
  $region24: #{_linear_attention_impl.1} parent=0 // pred_region
    _
  $region25: #{_linear_attention_impl.1} parent=0 // pred_fallthru
    _
  // Predicated region
  $region26: #{_linear_attention_impl.1} parent=0 // pred_check
    _
  $region27: #{_linear_attention_impl.1} parent=0 // pred_check_branch
    %26 = sbr.rel (0) target = $region29
  $region28: #{_linear_attention_impl.1} parent=0 // pred_region
    _
  $region29: #{_linear_attention_impl.1} parent=0 // pred_fallthru
    _
  // Predicated region
  $region30: #{_linear_attention_impl.1} parent=0 // pred_check
    _
  $region31: #{_linear_attention_impl.1} parent=0 // pred_check_branch
    %28 = sbr.rel (0) target = $region33
  $region32: #{_linear_attention_impl.1} parent=0 // pred_region
    _
  $region33: #{_linear_attention_impl.1} parent=0 // pred_fallthru
    _
  %v29 = vld [vmem:[%s0] sm:$0xff]
  %v30 = vld [vmem:[%s0 + $0x8] sm:$0xff]
  %v31 = vld [vmem:[%s0 + $0x10] sm:$0xff]
  %v32 = vld [vmem:[%s0 + $0x18] sm:$0xff]
  %v33 = vld [vmem:[%s0 + $0x20] sm:$0xff]
  %v34 = vld [vmem:[%s0 + $0x28] sm:$0xff]
  %v35 = vld [vmem:[%s0 + $0x30] sm:$0xff]
  %v36 = vld [vmem:[%s0 + $0x38] sm:$0xff]
  %v37 = vld [vmem:[%s0 + $0x40] sm:$0xff]
  %v38 = vld [vmem:[%s0 + $0x48] sm:$0xff]
  %v39 = vld [vmem:[%s0 + $0x50] sm:$0xff]
  %v40 = vld [vmem:[%s0 + $0x58] sm:$0xff]
  %v41 = vld [vmem:[%s0 + $0x60] sm:$0xff]
  %v42 = vld [vmem:[%s0 + $0x68] sm:$0xff]
  %v43 = vld [vmem:[%s0 + $0x70] sm:$0xff]
  %v44 = vld [vmem:[%s0 + $0x78] sm:$0xff]
  %v45 = vld [vmem:[%s1] sm:$0xff]
  %v46 = vld [vmem:[%s1 + $0x8] sm:$0xff]
  %v47 = vld [vmem:[%s1 + $0x10] sm:$0xff]
  %v48 = vld [vmem:[%s1 + $0x18] sm:$0xff]
  %v49 = vld [vmem:[%s2] sm:$0x1]
  %v51 = vlaneseq
  %v52 = vshrl.u32 %v51, 7
  %v53 = vsub.s32 0, %v52
  %v54 = vrot.slane %v49, %v53
  %vm56 = vcmask 261120
  %v58 = vsel %vm56, %v29, 0
  %v61 = vsel %vm56, %v30, 0
  %v64 = vsel %vm56, %v31, 0
  %v67 = vsel %vm56, %v32, 0
  %v70 = vsel %vm56, %v33, 0
  %v73 = vsel %vm56, %v34, 0
  %v76 = vsel %vm56, %v35, 0
  %v79 = vsel %vm56, %v36, 0
  %v82 = vsel %vm56, %v37, 0
  %v85 = vsel %vm56, %v38, 0
  %v88 = vsel %vm56, %v39, 0
  %v91 = vsel %vm56, %v40, 0
  %v94 = vsel %vm56, %v41, 0
  %v97 = vsel %vm56, %v42, 0
  %v100 = vsel %vm56, %v43, 0
  %v103 = vsel %vm56, %v44, 0
  %105 = vmatprep.subr.mxu0 0.0
  %106 = vmatpush1.msra.mxu0 %v45
  %107 = vmatprep.subr.mxu0 0.0
  %108 = vmatpush1.msra.mxu0 %v46
  %109 = vmatprep.subr.mxu0 0.0
  %110 = vmatpush1.msra.mxu0 %v47
  %111 = vmatprep.subr.mxu0 0.0
  %112 = vmatpush1.msra.mxu0 %v48
  %113 = vmatprep.subr.mxu0 0.0
  %114 = vmatpush1.msra.mxu0 0.0
  %115 = vmatprep.subr.mxu0 0.0
  %116 = vmatpush1.msra.mxu0 0.0
  %117 = vmatprep.subr.mxu0 0.0
  %118 = vmatpush1.msra.mxu0 0.0
  %119 = vmatprep.subr.mxu0 0.0
  %120 = vmatpush1.msra.mxu0 0.0
  %121 = vmatprep.subr.mxu0 0.0
  %122 = vmatpush1.msra.mxu0 0.0
  %123 = vmatprep.subr.mxu0 0.0
  %124 = vmatpush1.msra.mxu0 0.0
  %125 = vmatprep.subr.mxu0 0.0
  %126 = vmatpush1.msra.mxu0 0.0
  %127 = vmatprep.subr.mxu0 0.0
  %128 = vmatpush1.msra.mxu0 0.0
  %129 = vmatprep.subr.mxu0 0.0
  %130 = vmatpush1.msra.mxu0 0.0
  %131 = vmatprep.subr.mxu0 0.0
  %132 = vmatpush1.msra.mxu0 0.0
  %133 = vmatprep.subr.mxu0 0.0
  %134 = vmatpush1.msra.mxu0 0.0
  %135 = vmatprep.subr.mxu0 0.0
  %136 = vmatpush1.msra.mxu0 0.0
  %137 = vmatprep.subr.mxu0 0.0
  %138 = vmatpush1.msra.mxu0 0.0
  %139 = vmatprep.subr.mxu0 0.0
  %140 = vmatpush1.msra.mxu0 0.0
  %141 = vmatprep.subr.mxu0 0.0
  %142 = vmatpush1.msra.mxu0 0.0
  %143 = vmatprep.subr.mxu0 0.0
  %144 = vmatpush1.msra.mxu0 0.0
  %145 = vmatprep.subr.mxu0 0.0
  %146 = vmatpush1.msra.mxu0 0.0
  %147 = vmatprep.subr.mxu0 0.0
  %148 = vmatpush1.msra.mxu0 0.0
  %149 = vmatprep.subr.mxu0 0.0
  %150 = vmatpush1.msra.mxu0 0.0
  %151 = vmatprep.subr.mxu0 0.0
  %152 = vmatpush1.msra.mxu0 0.0
  %153 = vmatprep.subr.mxu0 0.0
  %154 = vmatpush1.msra.mxu0 0.0
  %155 = vmatprep.subr.mxu0 0.0
  %156 = vmatpush1.msra.mxu0 0.0
  %157 = vmatprep.subr.mxu0 0.0
  %158 = vmatpush1.msra.mxu0 0.0
  %159 = vmatprep.subr.mxu0 0.0
  %160 = vmatpush1.msra.mxu0 0.0
  %161 = vmatprep.subr.mxu0 0.0
  %162 = vmatpush1.msra.mxu0 0.0
  %163 = vmatprep.subr.mxu0 0.0
  %164 = vmatpush1.msra.mxu0 0.0
  %165 = vmatprep.subr.mxu0 0.0
  %166 = vmatpush1.msra.mxu0 0.0
  %167 = vmatprep.subr.mxu0 0.0
  %168 = vmatpush1.msra.mxu0 0.0
  %169 = vmatprep.mubr.f32.mxu0 0.0
  %170 = vmatmul.mubr.f32.gmra.mrb[0].mxu0 %v58
  %v171 = vpop.f32.mrb[0].mxu0
  %v172 = vadd.f32 %v54, %v171
  %v173 = vpop.f32.mrb[0].mxu0
  %174 = vmatprep.mubr.f32.mxu0 0.0
  %175 = vmatmul.mubr.f32.gmra.mrb[0].mxu0 %v61
  %v176 = vpop.f32.mrb[0].mxu0
  %v177 = vadd.f32 %v54, %v176
  %v178 = vpop.f32.mrb[0].mxu0
  %179 = vmatprep.mubr.f32.mxu0 0.0
  %180 = vmatmul.mubr.f32.gmra.mrb[0].mxu0 %v64
  %v181 = vpop.f32.mrb[0].mxu0
  %v182 = vadd.f32 %v54, %v181
  %v183 = vpop.f32.mrb[0].mxu0
  %184 = vmatprep.mubr.f32.mxu0 0.0
  %185 = vmatmul.mubr.f32.gmra.mrb[0].mxu0 %v67
  %v186 = vpop.f32.mrb[0].mxu0
  %v187 = vadd.f32 %v54, %v186
  %v188 = vpop.f32.mrb[0].mxu0
  %189 = vmatprep.mubr.f32.mxu0 0.0
  %190 = vmatmul.mubr.f32.gmra.mrb[0].mxu0 %v70
  %v191 = vpop.f32.mrb[0].mxu0
  %v192 = vadd.f32 %v54, %v191
  %v193 = vpop.f32.mrb[0].mxu0
  %194 = vmatprep.mubr.f32.mxu0 0.0
  %195 = vmatmul.mubr.f32.gmra.mrb[0].mxu0 %v73
  %v196 = vpop.f32.mrb[0].mxu0
  %v197 = vadd.f32 %v54, %v196
  %v198 = vpop.f32.mrb[0].mxu0
  %199 = vmatprep.mubr.f32.mxu0 0.0
  %200 = vmatmul.mubr.f32.gmra.mrb[0].mxu0 %v76
  %v201 = vpop.f32.mrb[0].mxu0
  %v202 = vadd.f32 %v54, %v201
  %v203 = vpop.f32.mrb[0].mxu0
  %204 = vmatprep.mubr.f32.mxu0 0.0
  %205 = vmatmul.mubr.f32.gmra.mrb[0].mxu0 %v79
  %v206 = vpop.f32.mrb[0].mxu0
  %v207 = vadd.f32 %v54, %v206
  %v208 = vpop.f32.mrb[0].mxu0
  %209 = vmatprep.mubr.f32.mxu0 0.0
  %210 = vmatmul.mubr.f32.gmra.mrb[0].mxu0 %v82
  %v211 = vpop.f32.mrb[0].mxu0
  %v212 = vadd.f32 %v54, %v211
  %v213 = vpop.f32.mrb[0].mxu0
  %214 = vmatprep.mubr.f32.mxu0 0.0
  %215 = vmatmul.mubr.f32.gmra.mrb[0].mxu0 %v85
  %v216 = vpop.f32.mrb[0].mxu0
  %v217 = vadd.f32 %v54, %v216
  %v218 = vpop.f32.mrb[0].mxu0
  %219 = vmatprep.mubr.f32.mxu0 0.0
  %220 = vmatmul.mubr.f32.gmra.mrb[0].mxu0 %v88
  %v221 = vpop.f32.mrb[0].mxu0
  %v222 = vadd.f32 %v54, %v221
  %v223 = vpop.f32.mrb[0].mxu0
  %224 = vmatprep.mubr.f32.mxu0 0.0
  %225 = vmatmul.mubr.f32.gmra.mrb[0].mxu0 %v91
  %v226 = vpop.f32.mrb[0].mxu0
  %v227 = vadd.f32 %v54, %v226
  %v228 = vpop.f32.mrb[0].mxu0
  %229 = vmatprep.mubr.f32.mxu0 0.0
  %230 = vmatmul.mubr.f32.gmra.mrb[0].mxu0 %v94
  %v231 = vpop.f32.mrb[0].mxu0
  %v232 = vadd.f32 %v54, %v231
  %v233 = vpop.f32.mrb[0].mxu0
  %234 = vmatprep.mubr.f32.mxu0 0.0
  %235 = vmatmul.mubr.f32.gmra.mrb[0].mxu0 %v97
  %v236 = vpop.f32.mrb[0].mxu0
  %v237 = vadd.f32 %v54, %v236
  %v238 = vpop.f32.mrb[0].mxu0
  %239 = vmatprep.mubr.f32.mxu0 0.0
  %240 = vmatmul.mubr.f32.gmra.mrb[0].mxu0 %v100
  %v241 = vpop.f32.mrb[0].mxu0
  %v242 = vadd.f32 %v54, %v241
  %v243 = vpop.f32.mrb[0].mxu0
  %244 = vmatprep.mubr.f32.mxu0 0.0
  %245 = vmatmul.mubr.f32.gmra.mrb[0].mxu0 %v103
  %v246 = vpop.f32.mrb[0].mxu0
  %v247 = vadd.f32 %v54, %v246
  %v248 = vpop.f32.mrb[0].mxu0
  %249 = vdwg.mxu0
  %vm250 = vcmp.gt.f32.partialorder %v172, 0.0
  %vm251 = vcmp.gt.f32.partialorder %v177, 0.0
  %vm252 = vcmp.gt.f32.partialorder %v182, 0.0
  %vm253 = vcmp.gt.f32.partialorder %v187, 0.0
  %vm254 = vcmp.gt.f32.partialorder %v192, 0.0
  %vm255 = vcmp.gt.f32.partialorder %v197, 0.0
  %vm256 = vcmp.gt.f32.partialorder %v202, 0.0
  %vm257 = vcmp.gt.f32.partialorder %v207, 0.0
  %vm258 = vcmp.gt.f32.partialorder %v212, 0.0
  %vm259 = vcmp.gt.f32.partialorder %v217, 0.0
  %vm260 = vcmp.gt.f32.partialorder %v222, 0.0
  %vm261 = vcmp.gt.f32.partialorder %v227, 0.0
  %vm262 = vcmp.gt.f32.partialorder %v232, 0.0
  %vm263 = vcmp.gt.f32.partialorder %v237, 0.0
  %vm264 = vcmp.gt.f32.partialorder %v242, 0.0
  %vm265 = vcmp.gt.f32.partialorder %v247, 0.0
  %v266 = vmin.f32 %v172, 0.0
  %v267 = vmin.f32 %v177, 0.0
  %v268 = vmin.f32 %v182, 0.0
  %v269 = vmin.f32 %v187, 0.0
  %v270 = vmin.f32 %v192, 0.0
  %v271 = vmin.f32 %v197, 0.0
  %v272 = vmin.f32 %v202, 0.0
  %v273 = vmin.f32 %v207, 0.0
  %v274 = vmin.f32 %v212, 0.0
  %v275 = vmin.f32 %v217, 0.0
  %v276 = vmin.f32 %v222, 0.0
  %v277 = vmin.f32 %v227, 0.0
  %v278 = vmin.f32 %v232, 0.0
  %v279 = vmin.f32 %v237, 0.0
  %v280 = vmin.f32 %v242, 0.0
  %v281 = vmin.f32 %v247, 0.0
  %v282 = vmul.f32 %v266, 1.442695
  %v283 = vpow.pop %v282
  %v284 = vmul.f32 %v267, 1.442695
  %v285 = vpow.pop %v284
  %v286 = vmul.f32 %v268, 1.442695
  %v287 = vpow.pop %v286
  %v288 = vmul.f32 %v269, 1.442695
  %v289 = vpow.pop %v288
  %v290 = vmul.f32 %v270, 1.442695
  %v291 = vpow.pop %v290
  %v292 = vmul.f32 %v271, 1.442695
  %v293 = vpow.pop %v292
  %v294 = vmul.f32 %v272, 1.442695
  %v295 = vpow.pop %v294
  %v296 = vmul.f32 %v273, 1.442695
  %v297 = vpow.pop %v296
  %v298 = vmul.f32 %v274, 1.442695
  %v299 = vpow.pop %v298
  %v300 = vmul.f32 %v275, 1.442695
  %v301 = vpow.pop %v300
  %v302 = vmul.f32 %v276, 1.442695
  %v303 = vpow.pop %v302
  %v304 = vmul.f32 %v277, 1.442695
  %v305 = vpow.pop %v304
  %v306 = vmul.f32 %v278, 1.442695
  %v307 = vpow.pop %v306
  %v308 = vmul.f32 %v279, 1.442695
  %v309 = vpow.pop %v308
  %v310 = vmul.f32 %v280, 1.442695
  %v311 = vpow.pop %v310
  %v312 = vmul.f32 %v281, 1.442695
  %v313 = vpow.pop %v312
  %v314 = vsub.f32 %v283, 1.0
  %v315 = vsub.f32 %v285, 1.0
  %v316 = vsub.f32 %v287, 1.0
  %v317 = vsub.f32 %v289, 1.0
  %v318 = vsub.f32 %v291, 1.0
  %v319 = vsub.f32 %v293, 1.0
  %v320 = vsub.f32 %v295, 1.0
  %v321 = vsub.f32 %v297, 1.0
  %v322 = vsub.f32 %v299, 1.0
  %v323 = vsub.f32 %v301, 1.0
  %v324 = vsub.f32 %v303, 1.0
  %v325 = vsub.f32 %v305, 1.0
  %v326 = vsub.f32 %v307, 1.0
  %v327 = vsub.f32 %v309, 1.0
  %v328 = vsub.f32 %v311, 1.0
  %v329 = vsub.f32 %v313, 1.0
  %v330 = vsel %vm250, %v172, %v314
  %v331 = vsel %vm251, %v177, %v315
  %v332 = vsel %vm252, %v182, %v316
  %v333 = vsel %vm253, %v187, %v317
  %v334 = vsel %vm254, %v192, %v318
  %v335 = vsel %vm255, %v197, %v319
  %v336 = vsel %vm256, %v202, %v320
  %v337 = vsel %vm257, %v207, %v321
  %v338 = vsel %vm258, %v212, %v322
  %v339 = vsel %vm259, %v217, %v323
  %v340 = vsel %vm260, %v222, %v324
  %v341 = vsel %vm261, %v227, %v325
  %v342 = vsel %vm262, %v232, %v326
  %v343 = vsel %vm263, %v237, %v327
  %v344 = vsel %vm264, %v242, %v328
  %v345 = vsel %vm265, %v247, %v329
  %v346 = vadd.f32 %v330, 1.0
  %v347 = vadd.f32 %v331, 1.0
  %v348 = vadd.f32 %v332, 1.0
  %v349 = vadd.f32 %v333, 1.0
  %v350 = vadd.f32 %v334, 1.0
  %v351 = vadd.f32 %v335, 1.0
  %v352 = vadd.f32 %v336, 1.0
  %v353 = vadd.f32 %v337, 1.0
  %v354 = vadd.f32 %v338, 1.0
  %v355 = vadd.f32 %v339, 1.0
  %v356 = vadd.f32 %v340, 1.0
  %v357 = vadd.f32 %v341, 1.0
  %v358 = vadd.f32 %v342, 1.0
  %v359 = vadd.f32 %v343, 1.0
  %v360 = vadd.f32 %v344, 1.0
  %v361 = vadd.f32 %v345, 1.0
  %v362 = vld [vmem:[%s4] sm:$0xff]
  %v363 = vld [vmem:[%s4 + $0x8] sm:$0xff]
  %v364 = vld [vmem:[%s4 + $0x10] sm:$0xff]
  %v365 = vld [vmem:[%s4 + $0x18] sm:$0xff]
  %v366 = vld [vmem:[%s4 + $0x20] sm:$0xff]
  %v367 = vld [vmem:[%s4 + $0x28] sm:$0xff]
  %v368 = vld [vmem:[%s4 + $0x30] sm:$0xff]
  %v369 = vld [vmem:[%s4 + $0x38] sm:$0xff]
  %vm370 = vcmask 523264
  %v372 = vsel %vm370, %v346, 0
  %v375 = vsel %vm370, %v347, 0
  %v378 = vsel %vm370, %v348, 0
  %v381 = vsel %vm370, %v349, 0
  %v384 = vsel %vm370, %v350, 0
  %v387 = vsel %vm370, %v351, 0
  %v390 = vsel %vm370, %v352, 0
  %v393 = vsel %vm370, %v353, 0
  %v396 = vsel %vm370, %v354, 0
  %v399 = vsel %vm370, %v355, 0
  %v402 = vsel %vm370, %v356, 0
  %v405 = vsel %vm370, %v357, 0
  %v408 = vsel %vm370, %v358, 0
  %v411 = vsel %vm370, %v359, 0
  %v414 = vsel %vm370, %v360, 0
  %v417 = vsel %vm370, %v361, 0
  %419 = vmatprep.subr.mxu0 0.0
  %420 = vmatpush1.msra.mxu0 %v362
  %421 = vmatprep.subr.mxu0 0.0
  %422 = vmatpush1.msra.mxu0 %v363
  %423 = vmatprep.subr.mxu0 0.0
  %424 = vmatpush1.msra.mxu0 %v364
  %425 = vmatprep.subr.mxu0 0.0
  %426 = vmatpush1.msra.mxu0 %v365
  %427 = vmatprep.subr.mxu0 0.0
  %428 = vmatpush1.msra.mxu0 %v366
  %429 = vmatprep.subr.mxu0 0.0
  %430 = vmatpush1.msra.mxu0 %v367
  %431 = vmatprep.subr.mxu0 0.0
  %432 = vmatpush1.msra.mxu0 %v368
  %433 = vmatprep.subr.mxu0 0.0
  %434 = vmatpush1.msra.mxu0 %v369
  %435 = vmatprep.subr.mxu0 0.0
  %436 = vmatpush1.msra.mxu0 0.0
  %437 = vmatprep.subr.mxu0 0.0
  %438 = vmatpush1.msra.mxu0 0.0
  %439 = vmatprep.subr.mxu0 0.0
  %440 = vmatpush1.msra.mxu0 0.0
  %441 = vmatprep.subr.mxu0 0.0
  %442 = vmatpush1.msra.mxu0 0.0
  %443 = vmatprep.subr.mxu0 0.0
  %444 = vmatpush1.msra.mxu0 0.0
  %445 = vmatprep.subr.mxu0 0.0
  %446 = vmatpush1.msra.mxu0 0.0
  %447 = vmatprep.subr.mxu0 0.0
  %448 = vmatpush1.msra.mxu0 0.0
  %449 = vmatprep.subr.mxu0 0.0
  %450 = vmatpush1.msra.mxu0 0.0
  %451 = vmatprep.subr.mxu0 0.0
  %452 = vmatpush1.msra.mxu0 0.0
  %453 = vmatprep.subr.mxu0 0.0
  %454 = vmatpush1.msra.mxu0 0.0
  %455 = vmatprep.subr.mxu0 0.0
  %456 = vmatpush1.msra.mxu0 0.0
  %457 = vmatprep.subr.mxu0 0.0
  %458 = vmatpush1.msra.mxu0 0.0
  %459 = vmatprep.subr.mxu0 0.0
  %460 = vmatpush1.msra.mxu0 0.0
  %461 = vmatprep.subr.mxu0 0.0
  %462 = vmatpush1.msra.mxu0 0.0
  %463 = vmatprep.subr.mxu0 0.0
  %464 = vmatpush1.msra.mxu0 0.0
  %465 = vmatprep.subr.mxu0 0.0
  %466 = vmatpush1.msra.mxu0 0.0
  %467 = vmatprep.subr.mxu0 0.0
  %468 = vmatpush1.msra.mxu0 0.0
  %469 = vmatprep.subr.mxu0 0.0
  %470 = vmatpush1.msra.mxu0 0.0
  %471 = vmatprep.subr.mxu0 0.0
  %472 = vmatpush1.msra.mxu0 0.0
  %473 = vmatprep.subr.mxu0 0.0
  %474 = vmatpush1.msra.mxu0 0.0
  %475 = vmatprep.subr.mxu0 0.0
  %476 = vmatpush1.msra.mxu0 0.0
  %477 = vmatprep.subr.mxu0 0.0
  %478 = vmatpush1.msra.mxu0 0.0
  %479 = vmatprep.subr.mxu0 0.0
  %480 = vmatpush1.msra.mxu0 0.0
  %481 = vmatprep.subr.mxu0 0.0
  %482 = vmatpush1.msra.mxu0 0.0
  %483 = vmatprep.mubr.f32.mxu0 0.0
  %484 = vmatmul.mubr.f32.gmra.mrb[0].mxu0 %v372
  %v485 = vpop.f32.mrb[0].mxu0
  %v486 = vadd.f32 0.0, %v485
  %v487 = vpop.f32.mrb[0].mxu0
  %488 = vmatprep.mubr.f32.mxu0 0.0
  %489 = vmatmul.mubr.f32.gmra.mrb[0].mxu0 %v375
  %v490 = vpop.f32.mrb[0].mxu0
  %v491 = vadd.f32 0.0, %v490
  %v492 = vpop.f32.mrb[0].mxu0
  %493 = vmatprep.mubr.f32.mxu0 0.0
  %494 = vmatmul.mubr.f32.gmra.mrb[0].mxu0 %v378
  %v495 = vpop.f32.mrb[0].mxu0
  %v496 = vadd.f32 0.0, %v495
  %v497 = vpop.f32.mrb[0].mxu0
  %498 = vmatprep.mubr.f32.mxu0 0.0
  %499 = vmatmul.mubr.f32.gmra.mrb[0].mxu0 %v381
  %v500 = vpop.f32.mrb[0].mxu0
  %v501 = vadd.f32 0.0, %v500
  %v502 = vpop.f32.mrb[0].mxu0
  %503 = vmatprep.mubr.f32.mxu0 0.0
  %504 = vmatmul.mubr.f32.gmra.mrb[0].mxu0 %v384
  %v505 = vpop.f32.mrb[0].mxu0
  %v506 = vadd.f32 0.0, %v505
  %v507 = vpop.f32.mrb[0].mxu0
  %508 = vmatprep.mubr.f32.mxu0 0.0
  %509 = vmatmul.mubr.f32.gmra.mrb[0].mxu0 %v387
  %v510 = vpop.f32.mrb[0].mxu0
  %v511 = vadd.f32 0.0, %v510
  %v512 = vpop.f32.mrb[0].mxu0
  %513 = vmatprep.mubr.f32.mxu0 0.0
  %514 = vmatmul.mubr.f32.gmra.mrb[0].mxu0 %v390
  %v515 = vpop.f32.mrb[0].mxu0
  %v516 = vadd.f32 0.0, %v515
  %v517 = vpop.f32.mrb[0].mxu0
  %518 = vmatprep.mubr.f32.mxu0 0.0
  %519 = vmatmul.mubr.f32.gmra.mrb[0].mxu0 %v393
  %v520 = vpop.f32.mrb[0].mxu0
  %v521 = vadd.f32 0.0, %v520
  %v522 = vpop.f32.mrb[0].mxu0
  %523 = vmatprep.mubr.f32.mxu0 0.0
  %524 = vmatmul.mubr.f32.gmra.mrb[0].mxu0 %v396
  %v525 = vpop.f32.mrb[0].mxu0
  %v526 = vadd.f32 0.0, %v525
  %v527 = vpop.f32.mrb[0].mxu0
  %528 = vmatprep.mubr.f32.mxu0 0.0
  %529 = vmatmul.mubr.f32.gmra.mrb[0].mxu0 %v399
  %v530 = vpop.f32.mrb[0].mxu0
  %v531 = vadd.f32 0.0, %v530
  %v532 = vpop.f32.mrb[0].mxu0
  %533 = vmatprep.mubr.f32.mxu0 0.0
  %534 = vmatmul.mubr.f32.gmra.mrb[0].mxu0 %v402
  %v535 = vpop.f32.mrb[0].mxu0
  %v536 = vadd.f32 0.0, %v535
  %v537 = vpop.f32.mrb[0].mxu0
  %538 = vmatprep.mubr.f32.mxu0 0.0
  %539 = vmatmul.mubr.f32.gmra.mrb[0].mxu0 %v405
  %v540 = vpop.f32.mrb[0].mxu0
  %v541 = vadd.f32 0.0, %v540
  %v542 = vpop.f32.mrb[0].mxu0
  %543 = vmatprep.mubr.f32.mxu0 0.0
  %544 = vmatmul.mubr.f32.gmra.mrb[0].mxu0 %v408
  %v545 = vpop.f32.mrb[0].mxu0
  %v546 = vadd.f32 0.0, %v545
  %v547 = vpop.f32.mrb[0].mxu0
  %548 = vmatprep.mubr.f32.mxu0 0.0
  %549 = vmatmul.mubr.f32.gmra.mrb[0].mxu0 %v411
  %v550 = vpop.f32.mrb[0].mxu0
  %v551 = vadd.f32 0.0, %v550
  %v552 = vpop.f32.mrb[0].mxu0
  %553 = vmatprep.mubr.f32.mxu0 0.0
  %554 = vmatmul.mubr.f32.gmra.mrb[0].mxu0 %v414
  %v555 = vpop.f32.mrb[0].mxu0
  %v556 = vadd.f32 0.0, %v555
  %v557 = vpop.f32.mrb[0].mxu0
  %558 = vmatprep.mubr.f32.mxu0 0.0
  %559 = vmatmul.mubr.f32.gmra.mrb[0].mxu0 %v417
  %v560 = vpop.f32.mrb[0].mxu0
  %v561 = vadd.f32 0.0, %v560
  %v562 = vpop.f32.mrb[0].mxu0
  %563 = vdwg.mxu0
  %v564 = vld [vmem:[%s3] sm:$0xff]
  %v565 = vld [vmem:[%s3 + $0x8] sm:$0xff]
  %v566 = vld [vmem:[%s3 + $0x10] sm:$0xff]
  %v567 = vld [vmem:[%s3 + $0x18] sm:$0xff]
  %v568 = vld [vmem:[%s3 + $0x20] sm:$0xff]
  %v569 = vld [vmem:[%s3 + $0x28] sm:$0xff]
  %v570 = vld [vmem:[%s3 + $0x30] sm:$0xff]
  %v571 = vld [vmem:[%s3 + $0x38] sm:$0xff]
  %v572 = vld [vmem:[%s3 + $0x40] sm:$0xff]
  %v573 = vld [vmem:[%s3 + $0x48] sm:$0xff]
  %v574 = vld [vmem:[%s3 + $0x50] sm:$0xff]
  %v575 = vld [vmem:[%s3 + $0x58] sm:$0xff]
  %v576 = vld [vmem:[%s3 + $0x60] sm:$0xff]
  %v577 = vld [vmem:[%s3 + $0x68] sm:$0xff]
  %v578 = vld [vmem:[%s3 + $0x70] sm:$0xff]
  %v579 = vld [vmem:[%s3 + $0x78] sm:$0xff]
  %v580 = vmul.f32 %v346, %v564
  %v581 = vmul.f32 %v347, %v565
  %v582 = vmul.f32 %v348, %v566
  %v583 = vmul.f32 %v349, %v567
  %v584 = vmul.f32 %v350, %v568
  %v585 = vmul.f32 %v351, %v569
  %v586 = vmul.f32 %v352, %v570
  %v587 = vmul.f32 %v353, %v571
  %v588 = vmul.f32 %v354, %v572
  %v589 = vmul.f32 %v355, %v573
  %v590 = vmul.f32 %v356, %v574
  %v591 = vmul.f32 %v357, %v575
  %v592 = vmul.f32 %v358, %v576
  %v593 = vmul.f32 %v359, %v577
  %v594 = vmul.f32 %v360, %v578
  %v595 = vmul.f32 %v361, %v579
  %s596 = scalar_lea.vmem %s3, 128
  %v597 = vld [vmem:[%s596] sm:$0xff]
  %v598 = vld [vmem:[%s596 + $0x8] sm:$0xff]
  %v599 = vld [vmem:[%s596 + $0x10] sm:$0xff]
  %v600 = vld [vmem:[%s596 + $0x18] sm:$0xff]
  %v601 = vld [vmem:[%s596 + $0x20] sm:$0xff]
  %v602 = vld [vmem:[%s596 + $0x28] sm:$0xff]
  %v603 = vld [vmem:[%s596 + $0x30] sm:$0xff]
  %v604 = vld [vmem:[%s596 + $0x38] sm:$0xff]
  %v605 = vld [vmem:[%s596 + $0x40] sm:$0xff]
  %v606 = vld [vmem:[%s596 + $0x48] sm:$0xff]
  %v607 = vld [vmem:[%s596 + $0x50] sm:$0xff]
  %v608 = vld [vmem:[%s596 + $0x58] sm:$0xff]
  %v609 = vld [vmem:[%s596 + $0x60] sm:$0xff]
  %v610 = vld [vmem:[%s596 + $0x68] sm:$0xff]
  %v611 = vld [vmem:[%s596 + $0x70] sm:$0xff]
  %v612 = vld [vmem:[%s596 + $0x78] sm:$0xff]
  %v613 = vmul.f32 %v486, %v597
  %v614 = vmul.f32 %v491, %v598
  %v615 = vmul.f32 %v496, %v599
  %v616 = vmul.f32 %v501, %v600
  %v617 = vmul.f32 %v506, %v601
  %v618 = vmul.f32 %v511, %v602
  %v619 = vmul.f32 %v516, %v603
  %v620 = vmul.f32 %v521, %v604
  %v621 = vmul.f32 %v526, %v605
  %v622 = vmul.f32 %v531, %v606
  %v623 = vmul.f32 %v536, %v607
  %v624 = vmul.f32 %v541, %v608
  %v625 = vmul.f32 %v546, %v609
  %v626 = vmul.f32 %v551, %v610
  %v627 = vmul.f32 %v556, %v611
  %v628 = vmul.f32 %v561, %v612
  %v629 = vadd.f32 %v580, %v613
  %v630 = vadd.f32 %v581, %v614
  %v631 = vadd.f32 %v582, %v615
  %v632 = vadd.f32 %v583, %v616
  %v633 = vadd.f32 %v584, %v617
  %v634 = vadd.f32 %v585, %v618
  %v635 = vadd.f32 %v586, %v619
  %v636 = vadd.f32 %v587, %v620
  %v637 = vadd.f32 %v588, %v621
  %v638 = vadd.f32 %v589, %v622
  %v639 = vadd.f32 %v590, %v623
  %v640 = vadd.f32 %v591, %v624
  %v641 = vadd.f32 %v592, %v625
  %v642 = vadd.f32 %v593, %v626
  %v643 = vadd.f32 %v594, %v627
  %v644 = vadd.f32 %v595, %v628
  %v645 = vld [vmem:[%s5] sm:$0xff]
  %v646 = vld [vmem:[%s5 + $0x8] sm:$0xff]
  %v647 = vld [vmem:[%s5 + $0x10] sm:$0xff]
  %v648 = vld [vmem:[%s5 + $0x18] sm:$0xff]
  %vm649 = vcmask 523520
  %v650 = vsel %vm649, %v346, 0.0
  %v651 = vsel %vm649, %v347, 0.0
  %v652 = vadd.f32 %v650, %v651
  %v653 = vsel %vm649, %v348, 0.0
  %v654 = vadd.f32 %v652, %v653
  %v655 = vsel %vm649, %v349, 0.0
  %v656 = vadd.f32 %v654, %v655
  %v657 = vsel %vm649, %v350, 0.0
  %v658 = vadd.f32 %v656, %v657
  %v659 = vsel %vm649, %v351, 0.0
  %v660 = vadd.f32 %v658, %v659
  %v661 = vsel %vm649, %v352, 0.0
  %v662 = vadd.f32 %v660, %v661
  %v663 = vsel %vm649, %v353, 0.0
  %v664 = vadd.f32 %v662, %v663
  %v665 = vrot.slane %v664, 4
  %v666 = vadd.f32 %v664, %v665
  %v667 = vrot.slane %v666, 2
  %v668 = vadd.f32 %v666, %v667
  %v669 = vrot.slane %v668, 1
  %v670 = vadd.f32 %v668, %v669
  %v671 = vrcp.pop 64.0
  %v672 = vmul.f32 %v670, %v671
  %674 = vrot.lane.b32.xlu0 %v672, 96
  %v675 = vpop.permute.xlu0 %674
  %v677 = vmul.f32 %v346, %v675
  %v678 = vmul.f32 %v347, %v675
  %v679 = vmul.f32 %v348, %v675
  %v680 = vmul.f32 %v349, %v675
  %v681 = vmul.f32 %v350, %v675
  %v682 = vmul.f32 %v351, %v675
  %v683 = vmul.f32 %v352, %v675
  %v684 = vmul.f32 %v353, %v675
  %v686 = vsel %vm56, %v677, 0
  %v689 = vsel %vm56, %v678, 0
  %v692 = vsel %vm56, %v679, 0
  %v695 = vsel %vm56, %v680, 0
  %v698 = vsel %vm56, %v681, 0
  %v701 = vsel %vm56, %v682, 0
  %v704 = vsel %vm56, %v683, 0
  %v707 = vsel %vm56, %v684, 0
  %709 = vmatprep.subr.mxu0 0.0
  %710 = vmatpush1.msra.mxu0 %v645
  %711 = vmatprep.subr.mxu0 0.0
  %712 = vmatpush1.msra.mxu0 %v646
  %713 = vmatprep.subr.mxu0 0.0
  %714 = vmatpush1.msra.mxu0 %v647
  %715 = vmatprep.subr.mxu0 0.0
  %716 = vmatpush1.msra.mxu0 %v648
  %717 = vmatprep.subr.mxu0 0.0
  %718 = vmatpush1.msra.mxu0 0.0
  %719 = vmatprep.subr.mxu0 0.0
  %720 = vmatpush1.msra.mxu0 0.0
  %721 = vmatprep.subr.mxu0 0.0
  %722 = vmatpush1.msra.mxu0 0.0
  %723 = vmatprep.subr.mxu0 0.0
  %724 = vmatpush1.msra.mxu0 0.0
  %725 = vmatprep.subr.mxu0 0.0
  %726 = vmatpush1.msra.mxu0 0.0
  %727 = vmatprep.subr.mxu0 0.0
  %728 = vmatpush1.msra.mxu0 0.0
  %729 = vmatprep.subr.mxu0 0.0
  %730 = vmatpush1.msra.mxu0 0.0
  %731 = vmatprep.subr.mxu0 0.0
  %732 = vmatpush1.msra.mxu0 0.0
  %733 = vmatprep.subr.mxu0 0.0
  %734 = vmatpush1.msra.mxu0 0.0
  %735 = vmatprep.subr.mxu0 0.0
  %736 = vmatpush1.msra.mxu0 0.0
  %737 = vmatprep.subr.mxu0 0.0
  %738 = vmatpush1.msra.mxu0 0.0
  %739 = vmatprep.subr.mxu0 0.0
  %740 = vmatpush1.msra.mxu0 0.0
  %741 = vmatprep.subr.mxu0 0.0
  %742 = vmatpush1.msra.mxu0 0.0
  %743 = vmatprep.subr.mxu0 0.0
  %744 = vmatpush1.msra.mxu0 0.0
  %745 = vmatprep.subr.mxu0 0.0
  %746 = vmatpush1.msra.mxu0 0.0
  %747 = vmatprep.subr.mxu0 0.0
  %748 = vmatpush1.msra.mxu0 0.0
  %749 = vmatprep.subr.mxu0 0.0
  %750 = vmatpush1.msra.mxu0 0.0
  %751 = vmatprep.subr.mxu0 0.0
  %752 = vmatpush1.msra.mxu0 0.0
  %753 = vmatprep.subr.mxu0 0.0
  %754 = vmatpush1.msra.mxu0 0.0
  %755 = vmatprep.subr.mxu0 0.0
  %756 = vmatpush1.msra.mxu0 0.0
  %757 = vmatprep.subr.mxu0 0.0
  %758 = vmatpush1.msra.mxu0 0.0
  %759 = vmatprep.subr.mxu0 0.0
  %760 = vmatpush1.msra.mxu0 0.0
  %761 = vmatprep.subr.mxu0 0.0
  %762 = vmatpush1.msra.mxu0 0.0
  %763 = vmatprep.subr.mxu0 0.0
  %764 = vmatpush1.msra.mxu0 0.0
  %765 = vmatprep.subr.mxu0 0.0
  %766 = vmatpush1.msra.mxu0 0.0
  %767 = vmatprep.subr.mxu0 0.0
  %768 = vmatpush1.msra.mxu0 0.0
  %769 = vmatprep.subr.mxu0 0.0
  %770 = vmatpush1.msra.mxu0 0.0
  %771 = vmatprep.subr.mxu0 0.0
  %772 = vmatpush1.msra.mxu0 0.0
  %773 = vmatprep.mubr.f32.mxu0 0.0
  %774 = vmatmul.mubr.f32.gmra.mrb[0].mxu0 %v686
  %v775 = vpop.f32.mrb[0].mxu0
  %v776 = vadd.f32 1e-06, %v775
  %v777 = vpop.f32.mrb[0].mxu0
  %778 = vmatprep.mubr.f32.mxu0 0.0
  %779 = vmatmul.mubr.f32.gmra.mrb[0].mxu0 %v689
  %v780 = vpop.f32.mrb[0].mxu0
  %v781 = vadd.f32 1e-06, %v780
  %v782 = vpop.f32.mrb[0].mxu0
  %783 = vmatprep.mubr.f32.mxu0 0.0
  %784 = vmatmul.mubr.f32.gmra.mrb[0].mxu0 %v692
  %v785 = vpop.f32.mrb[0].mxu0
  %v786 = vadd.f32 1e-06, %v785
  %v787 = vpop.f32.mrb[0].mxu0
  %788 = vmatprep.mubr.f32.mxu0 0.0
  %789 = vmatmul.mubr.f32.gmra.mrb[0].mxu0 %v695
  %v790 = vpop.f32.mrb[0].mxu0
  %v791 = vadd.f32 1e-06, %v790
  %v792 = vpop.f32.mrb[0].mxu0
  %793 = vmatprep.mubr.f32.mxu0 0.0
  %794 = vmatmul.mubr.f32.gmra.mrb[0].mxu0 %v698
  %v795 = vpop.f32.mrb[0].mxu0
  %v796 = vadd.f32 1e-06, %v795
  %v797 = vpop.f32.mrb[0].mxu0
  %798 = vmatprep.mubr.f32.mxu0 0.0
  %799 = vmatmul.mubr.f32.gmra.mrb[0].mxu0 %v701
  %v800 = vpop.f32.mrb[0].mxu0
  %v801 = vadd.f32 1e-06, %v800
  %v802 = vpop.f32.mrb[0].mxu0
  %803 = vmatprep.mubr.f32.mxu0 0.0
  %804 = vmatmul.mubr.f32.gmra.mrb[0].mxu0 %v704
  %v805 = vpop.f32.mrb[0].mxu0
  %v806 = vadd.f32 1e-06, %v805
  %v807 = vpop.f32.mrb[0].mxu0
  %808 = vmatprep.mubr.f32.mxu0 0.0
  %809 = vmatmul.mubr.f32.gmra.mrb[0].mxu0 %v707
  %v810 = vpop.f32.mrb[0].mxu0
  %v811 = vadd.f32 1e-06, %v810
  %v812 = vpop.f32.mrb[0].mxu0
  %813 = vdwg.mxu0
  %v814 = vrcp.pop %v776
  %v815 = vrcp.pop %v781
  %v816 = vrcp.pop %v786
  %v817 = vrcp.pop %v791
  %v818 = vrcp.pop %v796
  %v819 = vrcp.pop %v801
  %v820 = vrcp.pop %v806
  %v821 = vrcp.pop %v811
  %830 = vrot.lane.b32.xlu0 %v629, 96
  %v831 = vpop.permute.xlu0 %830
  %832 = vrot.lane.b32.xlu0 %v630, 96
  %v833 = vpop.permute.xlu0 %832
  %834 = vrot.lane.b32.xlu0 %v631, 96
  %v835 = vpop.permute.xlu0 %834
  %836 = vrot.lane.b32.xlu0 %v632, 96
  %v837 = vpop.permute.xlu0 %836
  %838 = vrot.lane.b32.xlu0 %v633, 96
  %v839 = vpop.permute.xlu0 %838
  %840 = vrot.lane.b32.xlu0 %v634, 96
  %v841 = vpop.permute.xlu0 %840
  %842 = vrot.lane.b32.xlu0 %v635, 96
  %v843 = vpop.permute.xlu0 %842
  %844 = vrot.lane.b32.xlu0 %v636, 96
  %v845 = vpop.permute.xlu0 %844
  %854 = vxpose.xlu0.b32.start [1/16] %v831, 128
  %855 = vxpose.xlu0.b32.cont [2/16] %v833, 128
  %856 = vxpose.xlu0.b32.cont [3/16] %v835, 128
  %857 = vxpose.xlu0.b32.cont [4/16] %v837, 128
  %858 = vxpose.xlu0.b32.cont [5/16] %v839, 128
  %859 = vxpose.xlu0.b32.cont [6/16] %v841, 128
  %860 = vxpose.xlu0.b32.cont [7/16] %v843, 128
  %861 = vxpose.xlu0.b32.cont [8/16] %v845, 128
  %862 = vxpose.xlu0.b32.cont [9/16] 0.0, 128
  %863 = vxpose.xlu0.b32.cont [10/16] 0.0, 128
  %864 = vxpose.xlu0.b32.cont [11/16] 0.0, 128
  %865 = vxpose.xlu0.b32.cont [12/16] 0.0, 128
  %866 = vxpose.xlu0.b32.cont [13/16] 0.0, 128
  %867 = vxpose.xlu0.b32.cont [14/16] 0.0, 128
  %868 = vxpose.xlu0.b32.cont [15/16] 0.0, 128
  %869 = vxpose.xlu0.b32.end [16/16] 0.0, 128
  %v870 = vpop.trf.xlu0
  %v871 = vpop.trf.xlu0
  %v872 = vpop.trf.xlu0
  %v873 = vpop.trf.xlu0
  %v874 = vpop.trf.xlu0
  %v875 = vpop.trf.xlu0
  %v876 = vpop.trf.xlu0
  %v877 = vpop.trf.xlu0
  %v878 = vpop.trf.xlu0
  %v879 = vpop.trf.xlu0
  %v880 = vpop.trf.xlu0
  %v881 = vpop.trf.xlu0
  %v882 = vpop.trf.xlu0
  %v883 = vpop.trf.xlu0
  %v884 = vpop.trf.xlu0
  %v885 = vpop.trf.xlu0
  %v887 = vsel %vm370, %v870, 0
  %v890 = vsel %vm370, %v871, 0
  %v893 = vsel %vm370, %v872, 0
  %v896 = vsel %vm370, %v873, 0
  %898 = vmatprep.subr.mxu0 0.0
  %899 = vmatpush1.msra.mxu0 %v29
  %900 = vmatprep.subr.mxu0 0.0
  %901 = vmatpush1.msra.mxu0 %v30
  %902 = vmatprep.subr.mxu0 0.0
  %903 = vmatpush1.msra.mxu0 %v31
  %904 = vmatprep.subr.mxu0 0.0
  %905 = vmatpush1.msra.mxu0 %v32
  %906 = vmatprep.subr.mxu0 0.0
  %907 = vmatpush1.msra.mxu0 %v33
  %908 = vmatprep.subr.mxu0 0.0
  %909 = vmatpush1.msra.mxu0 %v34
  %910 = vmatprep.subr.mxu0 0.0
  %911 = vmatpush1.msra.mxu0 %v35
  %912 = vmatprep.subr.mxu0 0.0
  %913 = vmatpush1.msra.mxu0 %v36
  %914 = vmatprep.subr.mxu0 0.0
  %915 = vmatpush1.msra.mxu0 0.0
  %916 = vmatprep.subr.mxu0 0.0
  %917 = vmatpush1.msra.mxu0 0.0
  %918 = vmatprep.subr.mxu0 0.0
  %919 = vmatpush1.msra.mxu0 0.0
  %920 = vmatprep.subr.mxu0 0.0
  %921 = vmatpush1.msra.mxu0 0.0
  %922 = vmatprep.subr.mxu0 0.0
  %923 = vmatpush1.msra.mxu0 0.0
  %924 = vmatprep.subr.mxu0 0.0
  %925 = vmatpush1.msra.mxu0 0.0
  %926 = vmatprep.subr.mxu0 0.0
  %927 = vmatpush1.msra.mxu0 0.0
  %928 = vmatprep.subr.mxu0 0.0
  %929 = vmatpush1.msra.mxu0 0.0
  %930 = vmatprep.subr.mxu0 0.0
  %931 = vmatpush1.msra.mxu0 0.0
  %932 = vmatprep.subr.mxu0 0.0
  %933 = vmatpush1.msra.mxu0 0.0
  %934 = vmatprep.subr.mxu0 0.0
  %935 = vmatpush1.msra.mxu0 0.0
  %936 = vmatprep.subr.mxu0 0.0
  %937 = vmatpush1.msra.mxu0 0.0
  %938 = vmatprep.subr.mxu0 0.0
  %939 = vmatpush1.msra.mxu0 0.0
  %940 = vmatprep.subr.mxu0 0.0
  %941 = vmatpush1.msra.mxu0 0.0
  %942 = vmatprep.subr.mxu0 0.0
  %943 = vmatpush1.msra.mxu0 0.0
  %944 = vmatprep.subr.mxu0 0.0
  %945 = vmatpush1.msra.mxu0 0.0
  %946 = vmatprep.subr.mxu0 0.0
  %947 = vmatpush1.msra.mxu0 0.0
  %948 = vmatprep.subr.mxu0 0.0
  %949 = vmatpush1.msra.mxu0 0.0
  %950 = vmatprep.subr.mxu0 0.0
  %951 = vmatpush1.msra.mxu0 0.0
  %952 = vmatprep.subr.mxu0 0.0
  %953 = vmatpush1.msra.mxu0 0.0
  %954 = vmatprep.subr.mxu0 0.0
  %955 = vmatpush1.msra.mxu0 0.0
  %956 = vmatprep.subr.mxu0 0.0
  %957 = vmatpush1.msra.mxu0 0.0
  %958 = vmatprep.subr.mxu0 0.0
  %959 = vmatpush1.msra.mxu0 0.0
  %960 = vmatprep.subr.mxu0 0.0
  %961 = vmatpush1.msra.mxu0 0.0
  %962 = vmatprep.mubr.f32.mxu0 0.0
  %963 = vmatmul.mubr.f32.gmra.mrb[0].mxu0 %v887
  %v964 = vpop.f32.mrb[0].mxu0
  %v965 = vadd.f32 0.0, %v964
  %v966 = vpop.f32.mrb[0].mxu0
  %967 = vmatprep.mubr.f32.mxu0 0.0
  %968 = vmatmul.mubr.f32.gmra.mrb[0].mxu0 %v890
  %v969 = vpop.f32.mrb[0].mxu0
  %v970 = vadd.f32 0.0, %v969
  %v971 = vpop.f32.mrb[0].mxu0
  %972 = vmatprep.mubr.f32.mxu0 0.0
  %973 = vmatmul.mubr.f32.gmra.mrb[0].mxu0 %v893
  %v974 = vpop.f32.mrb[0].mxu0
  %v975 = vadd.f32 0.0, %v974
  %v976 = vpop.f32.mrb[0].mxu0
  %977 = vmatprep.mubr.f32.mxu0 0.0
  %978 = vmatmul.mubr.f32.gmra.mrb[0].mxu0 %v896
  %v979 = vpop.f32.mrb[0].mxu0
  %v980 = vadd.f32 0.0, %v979
  %v981 = vpop.f32.mrb[0].mxu0
  %982 = vdwg.mxu0
  %v983 = vmul.f32 %v965, 0.015625
  %v984 = vmul.f32 %v970, 0.015625
  %v985 = vmul.f32 %v975, 0.015625
  %v986 = vmul.f32 %v980, 0.015625
  %v987 = vmul.f32 %v983, %v645
  %v988 = vmul.f32 %v984, %v646
  %v989 = vmul.f32 %v985, %v647
  %v990 = vmul.f32 %v986, %v648
  %v991 = vsel %vm56, %v629, 0
  %v993 = vsel %vm56, %v630, 0
  %v995 = vsel %vm56, %v631, 0
  %v997 = vsel %vm56, %v632, 0
  %v999 = vsel %vm56, %v633, 0
  %v1001 = vsel %vm56, %v634, 0
  %v1003 = vsel %vm56, %v635, 0
  %v1005 = vsel %vm56, %v636, 0
  %1007 = vmatprep.subr.mxu0 0.0
  %1008 = vmatpush1.msra.mxu0 %v987
  %1009 = vmatprep.subr.mxu0 0.0
  %1010 = vmatpush1.msra.mxu0 %v988
  %1011 = vmatprep.subr.mxu0 0.0
  %1012 = vmatpush1.msra.mxu0 %v989
  %1013 = vmatprep.subr.mxu0 0.0
  %1014 = vmatpush1.msra.mxu0 %v990
  %1015 = vmatprep.subr.mxu0 0.0
  %1016 = vmatpush1.msra.mxu0 0.0
  %1017 = vmatprep.subr.mxu0 0.0
  %1018 = vmatpush1.msra.mxu0 0.0
  %1019 = vmatprep.subr.mxu0 0.0
  %1020 = vmatpush1.msra.mxu0 0.0
  %1021 = vmatprep.subr.mxu0 0.0
  %1022 = vmatpush1.msra.mxu0 0.0
  %1023 = vmatprep.subr.mxu0 0.0
  %1024 = vmatpush1.msra.mxu0 0.0
  %1025 = vmatprep.subr.mxu0 0.0
  %1026 = vmatpush1.msra.mxu0 0.0
  %1027 = vmatprep.subr.mxu0 0.0
  %1028 = vmatpush1.msra.mxu0 0.0
  %1029 = vmatprep.subr.mxu0 0.0
  %1030 = vmatpush1.msra.mxu0 0.0
  %1031 = vmatprep.subr.mxu0 0.0
  %1032 = vmatpush1.msra.mxu0 0.0
  %1033 = vmatprep.subr.mxu0 0.0
  %1034 = vmatpush1.msra.mxu0 0.0
  %1035 = vmatprep.subr.mxu0 0.0
  %1036 = vmatpush1.msra.mxu0 0.0
  %1037 = vmatprep.subr.mxu0 0.0
  %1038 = vmatpush1.msra.mxu0 0.0
  %1039 = vmatprep.subr.mxu0 0.0
  %1040 = vmatpush1.msra.mxu0 0.0
  %1041 = vmatprep.subr.mxu0 0.0
  %1042 = vmatpush1.msra.mxu0 0.0
  %1043 = vmatprep.subr.mxu0 0.0
  %1044 = vmatpush1.msra.mxu0 0.0
  %1045 = vmatprep.subr.mxu0 0.0
  %1046 = vmatpush1.msra.mxu0 0.0
  %1047 = vmatprep.subr.mxu0 0.0
  %1048 = vmatpush1.msra.mxu0 0.0
  %1049 = vmatprep.subr.mxu0 0.0
  %1050 = vmatpush1.msra.mxu0 0.0
  %1051 = vmatprep.subr.mxu0 0.0
  %1052 = vmatpush1.msra.mxu0 0.0
  %1053 = vmatprep.subr.mxu0 0.0
  %1054 = vmatpush1.msra.mxu0 0.0
  %1055 = vmatprep.subr.mxu0 0.0
  %1056 = vmatpush1.msra.mxu0 0.0
  %1057 = vmatprep.subr.mxu0 0.0
  %1058 = vmatpush1.msra.mxu0 0.0
  %1059 = vmatprep.subr.mxu0 0.0
  %1060 = vmatpush1.msra.mxu0 0.0
  %1061 = vmatprep.subr.mxu0 0.0
  %1062 = vmatpush1.msra.mxu0 0.0
  %1063 = vmatprep.subr.mxu0 0.0
  %1064 = vmatpush1.msra.mxu0 0.0
  %1065 = vmatprep.subr.mxu0 0.0
  %1066 = vmatpush1.msra.mxu0 0.0
  %1067 = vmatprep.subr.mxu0 0.0
  %1068 = vmatpush1.msra.mxu0 0.0
  %1069 = vmatprep.subr.mxu0 0.0
  %1070 = vmatpush1.msra.mxu0 0.0
  %1071 = vmatprep.mubr.f32.mxu0 0.0
  %1072 = vmatmul.mubr.f32.gmra.mrb[0].mxu0 %v991
  %v1073 = vpop.f32.mrb[0].mxu0
  %v1074 = vadd.f32 0.0, %v1073
  %v1075 = vpop.f32.mrb[0].mxu0
  %1076 = vmatprep.mubr.f32.mxu0 0.0
  %1077 = vmatmul.mubr.f32.gmra.mrb[0].mxu0 %v993
  %v1078 = vpop.f32.mrb[0].mxu0
  %v1079 = vadd.f32 0.0, %v1078
  %v1080 = vpop.f32.mrb[0].mxu0
  %1081 = vmatprep.mubr.f32.mxu0 0.0
  %1082 = vmatmul.mubr.f32.gmra.mrb[0].mxu0 %v995
  %v1083 = vpop.f32.mrb[0].mxu0
  %v1084 = vadd.f32 0.0, %v1083
  %v1085 = vpop.f32.mrb[0].mxu0
  %1086 = vmatprep.mubr.f32.mxu0 0.0
  %1087 = vmatmul.mubr.f32.gmra.mrb[0].mxu0 %v997
  %v1088 = vpop.f32.mrb[0].mxu0
  %v1089 = vadd.f32 0.0, %v1088
  %v1090 = vpop.f32.mrb[0].mxu0
  %1091 = vmatprep.mubr.f32.mxu0 0.0
  %1092 = vmatmul.mubr.f32.gmra.mrb[0].mxu0 %v999
  %v1093 = vpop.f32.mrb[0].mxu0
  %v1094 = vadd.f32 0.0, %v1093
  %v1095 = vpop.f32.mrb[0].mxu0
  %1096 = vmatprep.mubr.f32.mxu0 0.0
  %1097 = vmatmul.mubr.f32.gmra.mrb[0].mxu0 %v1001
  %v1098 = vpop.f32.mrb[0].mxu0
  %v1099 = vadd.f32 0.0, %v1098
  %v1100 = vpop.f32.mrb[0].mxu0
  %1101 = vmatprep.mubr.f32.mxu0 0.0
  %1102 = vmatmul.mubr.f32.gmra.mrb[0].mxu0 %v1003
  %v1103 = vpop.f32.mrb[0].mxu0
  %v1104 = vadd.f32 0.0, %v1103
  %v1105 = vpop.f32.mrb[0].mxu0
  %1106 = vmatprep.mubr.f32.mxu0 0.0
  %1107 = vmatmul.mubr.f32.gmra.mrb[0].mxu0 %v1005
  %v1108 = vpop.f32.mrb[0].mxu0
  %v1109 = vadd.f32 0.0, %v1108
  %v1110 = vpop.f32.mrb[0].mxu0
  %1111 = vdwg.mxu0
  %v1112 = vmul.f32 %v1074, %v814
  %v1113 = vmul.f32 %v1079, %v815
  %v1114 = vmul.f32 %v1084, %v816
  %v1115 = vmul.f32 %v1089, %v817
  %v1116 = vmul.f32 %v1094, %v818
  %v1117 = vmul.f32 %v1099, %v819
  %v1118 = vmul.f32 %v1104, %v820
  %v1119 = vmul.f32 %v1109, %v821
  %v1120 = vsel %vm649, %v354, 0.0
  %v1121 = vsel %vm649, %v355, 0.0
  %v1122 = vadd.f32 %v1120, %v1121
  %v1123 = vsel %vm649, %v356, 0.0
  %v1124 = vadd.f32 %v1122, %v1123
  %v1125 = vsel %vm649, %v357, 0.0
  %v1126 = vadd.f32 %v1124, %v1125
  %v1127 = vsel %vm649, %v358, 0.0
  %v1128 = vadd.f32 %v1126, %v1127
  %v1129 = vsel %vm649, %v359, 0.0
  %v1130 = vadd.f32 %v1128, %v1129
  %v1131 = vsel %vm649, %v360, 0.0
  %v1132 = vadd.f32 %v1130, %v1131
  %v1133 = vsel %vm649, %v361, 0.0
  %v1134 = vadd.f32 %v1132, %v1133
  %v1135 = vrot.slane %v1134, 4
  %v1136 = vadd.f32 %v1134, %v1135
  %v1137 = vrot.slane %v1136, 2
  %v1138 = vadd.f32 %v1136, %v1137
  %v1139 = vrot.slane %v1138, 1
  %v1140 = vadd.f32 %v1138, %v1139
  %v1141 = vmul.f32 %v1140, %v671
  %1143 = vrot.lane.b32.xlu0 %v1141, 96
  %v1144 = vpop.permute.xlu0 %1143
  %v1146 = vmul.f32 %v354, %v1144
  %v1147 = vmul.f32 %v355, %v1144
  %v1148 = vmul.f32 %v356, %v1144
  %v1149 = vmul.f32 %v357, %v1144
  %v1150 = vmul.f32 %v358, %v1144
  %v1151 = vmul.f32 %v359, %v1144
  %v1152 = vmul.f32 %v360, %v1144
  %v1153 = vmul.f32 %v361, %v1144
  %v1155 = vsel %vm56, %v1146, 0
  %v1158 = vsel %vm56, %v1147, 0
  %v1161 = vsel %vm56, %v1148, 0
  %v1164 = vsel %vm56, %v1149, 0
  %v1167 = vsel %vm56, %v1150, 0
  %v1170 = vsel %vm56, %v1151, 0
  %v1173 = vsel %vm56, %v1152, 0
  %v1176 = vsel %vm56, %v1153, 0
  %1178 = vmatprep.subr.mxu0 0.0
  %1179 = vmatpush1.msra.mxu0 %v645
  %1180 = vmatprep.subr.mxu0 0.0
  %1181 = vmatpush1.msra.mxu0 %v646
  %1182 = vmatprep.subr.mxu0 0.0
  %1183 = vmatpush1.msra.mxu0 %v647
  %1184 = vmatprep.subr.mxu0 0.0
  %1185 = vmatpush1.msra.mxu0 %v648
  %1186 = vmatprep.subr.mxu0 0.0
  %1187 = vmatpush1.msra.mxu0 0.0
  %1188 = vmatprep.subr.mxu0 0.0
  %1189 = vmatpush1.msra.mxu0 0.0
  %1190 = vmatprep.subr.mxu0 0.0
  %1191 = vmatpush1.msra.mxu0 0.0
  %1192 = vmatprep.subr.mxu0 0.0
  %1193 = vmatpush1.msra.mxu0 0.0
  %1194 = vmatprep.subr.mxu0 0.0
  %1195 = vmatpush1.msra.mxu0 0.0
  %1196 = vmatprep.subr.mxu0 0.0
  %1197 = vmatpush1.msra.mxu0 0.0
  %1198 = vmatprep.subr.mxu0 0.0
  %1199 = vmatpush1.msra.mxu0 0.0
  %1200 = vmatprep.subr.mxu0 0.0
  %1201 = vmatpush1.msra.mxu0 0.0
  %1202 = vmatprep.subr.mxu0 0.0
  %1203 = vmatpush1.msra.mxu0 0.0
  %1204 = vmatprep.subr.mxu0 0.0
  %1205 = vmatpush1.msra.mxu0 0.0
  %1206 = vmatprep.subr.mxu0 0.0
  %1207 = vmatpush1.msra.mxu0 0.0
  %1208 = vmatprep.subr.mxu0 0.0
  %1209 = vmatpush1.msra.mxu0 0.0
  %1210 = vmatprep.subr.mxu0 0.0
  %1211 = vmatpush1.msra.mxu0 0.0
  %1212 = vmatprep.subr.mxu0 0.0
  %1213 = vmatpush1.msra.mxu0 0.0
  %1214 = vmatprep.subr.mxu0 0.0
  %1215 = vmatpush1.msra.mxu0 0.0
  %1216 = vmatprep.subr.mxu0 0.0
  %1217 = vmatpush1.msra.mxu0 0.0
  %1218 = vmatprep.subr.mxu0 0.0
  %1219 = vmatpush1.msra.mxu0 0.0
  %1220 = vmatprep.subr.mxu0 0.0
  %1221 = vmatpush1.msra.mxu0 0.0
  %1222 = vmatprep.subr.mxu0 0.0
  %1223 = vmatpush1.msra.mxu0 0.0
  %1224 = vmatprep.subr.mxu0 0.0
  %1225 = vmatpush1.msra.mxu0 0.0
  %1226 = vmatprep.subr.mxu0 0.0
  %1227 = vmatpush1.msra.mxu0 0.0
  %1228 = vmatprep.subr.mxu0 0.0
  %1229 = vmatpush1.msra.mxu0 0.0
  %1230 = vmatprep.subr.mxu0 0.0
  %1231 = vmatpush1.msra.mxu0 0.0
  %1232 = vmatprep.subr.mxu0 0.0
  %1233 = vmatpush1.msra.mxu0 0.0
  %1234 = vmatprep.subr.mxu0 0.0
  %1235 = vmatpush1.msra.mxu0 0.0
  %1236 = vmatprep.subr.mxu0 0.0
  %1237 = vmatpush1.msra.mxu0 0.0
  %1238 = vmatprep.subr.mxu0 0.0
  %1239 = vmatpush1.msra.mxu0 0.0
  %1240 = vmatprep.subr.mxu0 0.0
  %1241 = vmatpush1.msra.mxu0 0.0
  %1242 = vmatprep.mubr.f32.mxu0 0.0
  %1243 = vmatmul.mubr.f32.gmra.mrb[0].mxu0 %v1155
  %v1244 = vpop.f32.mrb[0].mxu0
  %v1245 = vadd.f32 1e-06, %v1244
  %v1246 = vpop.f32.mrb[0].mxu0
  %1247 = vmatprep.mubr.f32.mxu0 0.0
  %1248 = vmatmul.mubr.f32.gmra.mrb[0].mxu0 %v1158
  %v1249 = vpop.f32.mrb[0].mxu0
  %v1250 = vadd.f32 1e-06, %v1249
  %v1251 = vpop.f32.mrb[0].mxu0
  %1252 = vmatprep.mubr.f32.mxu0 0.0
  %1253 = vmatmul.mubr.f32.gmra.mrb[0].mxu0 %v1161
  %v1254 = vpop.f32.mrb[0].mxu0
  %v1255 = vadd.f32 1e-06, %v1254
  %v1256 = vpop.f32.mrb[0].mxu0
  %1257 = vmatprep.mubr.f32.mxu0 0.0
  %1258 = vmatmul.mubr.f32.gmra.mrb[0].mxu0 %v1164
  %v1259 = vpop.f32.mrb[0].mxu0
  %v1260 = vadd.f32 1e-06, %v1259
  %v1261 = vpop.f32.mrb[0].mxu0
  %1262 = vmatprep.mubr.f32.mxu0 0.0
  %1263 = vmatmul.mubr.f32.gmra.mrb[0].mxu0 %v1167
  %v1264 = vpop.f32.mrb[0].mxu0
  %v1265 = vadd.f32 1e-06, %v1264
  %v1266 = vpop.f32.mrb[0].mxu0
  %1267 = vmatprep.mubr.f32.mxu0 0.0
  %1268 = vmatmul.mubr.f32.gmra.mrb[0].mxu0 %v1170
  %v1269 = vpop.f32.mrb[0].mxu0
  %v1270 = vadd.f32 1e-06, %v1269
  %v1271 = vpop.f32.mrb[0].mxu0
  %1272 = vmatprep.mubr.f32.mxu0 0.0
  %1273 = vmatmul.mubr.f32.gmra.mrb[0].mxu0 %v1173
  %v1274 = vpop.f32.mrb[0].mxu0
  %v1275 = vadd.f32 1e-06, %v1274
  %v1276 = vpop.f32.mrb[0].mxu0
  %1277 = vmatprep.mubr.f32.mxu0 0.0
  %1278 = vmatmul.mubr.f32.gmra.mrb[0].mxu0 %v1176
  %v1279 = vpop.f32.mrb[0].mxu0
  %v1280 = vadd.f32 1e-06, %v1279
  %v1281 = vpop.f32.mrb[0].mxu0
  %1282 = vdwg.mxu0
  %v1283 = vrcp.pop %v1245
  %v1284 = vrcp.pop %v1250
  %v1285 = vrcp.pop %v1255
  %v1286 = vrcp.pop %v1260
  %v1287 = vrcp.pop %v1265
  %v1288 = vrcp.pop %v1270
  %v1289 = vrcp.pop %v1275
  %v1290 = vrcp.pop %v1280
  %1299 = vrot.lane.b32.xlu0 %v637, 96
  %v1300 = vpop.permute.xlu0 %1299
  %1301 = vrot.lane.b32.xlu0 %v638, 96
  %v1302 = vpop.permute.xlu0 %1301
  %1303 = vrot.lane.b32.xlu0 %v639, 96
  %v1304 = vpop.permute.xlu0 %1303
  %1305 = vrot.lane.b32.xlu0 %v640, 96
  %v1306 = vpop.permute.xlu0 %1305
  %1307 = vrot.lane.b32.xlu0 %v641, 96
  %v1308 = vpop.permute.xlu0 %1307
  %1309 = vrot.lane.b32.xlu0 %v642, 96
  %v1310 = vpop.permute.xlu0 %1309
  %1311 = vrot.lane.b32.xlu0 %v643, 96
  %v1312 = vpop.permute.xlu0 %1311
  %1313 = vrot.lane.b32.xlu0 %v644, 96
  %v1314 = vpop.permute.xlu0 %1313
  %1323 = vxpose.xlu0.b32.start [1/16] %v1300, 128
  %1324 = vxpose.xlu0.b32.cont [2/16] %v1302, 128
  %1325 = vxpose.xlu0.b32.cont [3/16] %v1304, 128
  %1326 = vxpose.xlu0.b32.cont [4/16] %v1306, 128
  %1327 = vxpose.xlu0.b32.cont [5/16] %v1308, 128
  %1328 = vxpose.xlu0.b32.cont [6/16] %v1310, 128
  %1329 = vxpose.xlu0.b32.cont [7/16] %v1312, 128
  %1330 = vxpose.xlu0.b32.cont [8/16] %v1314, 128
  %1331 = vxpose.xlu0.b32.cont [9/16] 0.0, 128
  %1332 = vxpose.xlu0.b32.cont [10/16] 0.0, 128
  %1333 = vxpose.xlu0.b32.cont [11/16] 0.0, 128
  %1334 = vxpose.xlu0.b32.cont [12/16] 0.0, 128
  %1335 = vxpose.xlu0.b32.cont [13/16] 0.0, 128
  %1336 = vxpose.xlu0.b32.cont [14/16] 0.0, 128
  %1337 = vxpose.xlu0.b32.cont [15/16] 0.0, 128
  %1338 = vxpose.xlu0.b32.end [16/16] 0.0, 128
  %v1339 = vpop.trf.xlu0
  %v1340 = vpop.trf.xlu0
  %v1341 = vpop.trf.xlu0
  %v1342 = vpop.trf.xlu0
  %v1343 = vpop.trf.xlu0
  %v1344 = vpop.trf.xlu0
  %v1345 = vpop.trf.xlu0
  %v1346 = vpop.trf.xlu0
  %v1347 = vpop.trf.xlu0
  %v1348 = vpop.trf.xlu0
  %v1349 = vpop.trf.xlu0
  %v1350 = vpop.trf.xlu0
  %v1351 = vpop.trf.xlu0
  %v1352 = vpop.trf.xlu0
  %v1353 = vpop.trf.xlu0
  %v1354 = vpop.trf.xlu0
  %v1356 = vsel %vm370, %v1339, 0
  %v1359 = vsel %vm370, %v1340, 0
  %v1362 = vsel %vm370, %v1341, 0
  %v1365 = vsel %vm370, %v1342, 0
  %1367 = vmatprep.subr.mxu0 0.0
  %1368 = vmatpush1.msra.mxu0 %v37
  %1369 = vmatprep.subr.mxu0 0.0
  %1370 = vmatpush1.msra.mxu0 %v38
  %1371 = vmatprep.subr.mxu0 0.0
  %1372 = vmatpush1.msra.mxu0 %v39
  %1373 = vmatprep.subr.mxu0 0.0
  %1374 = vmatpush1.msra.mxu0 %v40
  %1375 = vmatprep.subr.mxu0 0.0
  %1376 = vmatpush1.msra.mxu0 %v41
  %1377 = vmatprep.subr.mxu0 0.0
  %1378 = vmatpush1.msra.mxu0 %v42
  %1379 = vmatprep.subr.mxu0 0.0
  %1380 = vmatpush1.msra.mxu0 %v43
  %1381 = vmatprep.subr.mxu0 0.0
  %1382 = vmatpush1.msra.mxu0 %v44
  %1383 = vmatprep.subr.mxu0 0.0
  %1384 = vmatpush1.msra.mxu0 0.0
  %1385 = vmatprep.subr.mxu0 0.0
  %1386 = vmatpush1.msra.mxu0 0.0
  %1387 = vmatprep.subr.mxu0 0.0
  %1388 = vmatpush1.msra.mxu0 0.0
  %1389 = vmatprep.subr.mxu0 0.0
  %1390 = vmatpush1.msra.mxu0 0.0
  %1391 = vmatprep.subr.mxu0 0.0
  %1392 = vmatpush1.msra.mxu0 0.0
  %1393 = vmatprep.subr.mxu0 0.0
  %1394 = vmatpush1.msra.mxu0 0.0
  %1395 = vmatprep.subr.mxu0 0.0
  %1396 = vmatpush1.msra.mxu0 0.0
  %1397 = vmatprep.subr.mxu0 0.0
  %1398 = vmatpush1.msra.mxu0 0.0
  %1399 = vmatprep.subr.mxu0 0.0
  %1400 = vmatpush1.msra.mxu0 0.0
  %1401 = vmatprep.subr.mxu0 0.0
  %1402 = vmatpush1.msra.mxu0 0.0
  %1403 = vmatprep.subr.mxu0 0.0
  %1404 = vmatpush1.msra.mxu0 0.0
  %1405 = vmatprep.subr.mxu0 0.0
  %1406 = vmatpush1.msra.mxu0 0.0
  %1407 = vmatprep.subr.mxu0 0.0
  %1408 = vmatpush1.msra.mxu0 0.0
  %1409 = vmatprep.subr.mxu0 0.0
  %1410 = vmatpush1.msra.mxu0 0.0
  %1411 = vmatprep.subr.mxu0 0.0
  %1412 = vmatpush1.msra.mxu0 0.0
  %1413 = vmatprep.subr.mxu0 0.0
  %1414 = vmatpush1.msra.mxu0 0.0
  %1415 = vmatprep.subr.mxu0 0.0
  %1416 = vmatpush1.msra.mxu0 0.0
  %1417 = vmatprep.subr.mxu0 0.0
  %1418 = vmatpush1.msra.mxu0 0.0
  %1419 = vmatprep.subr.mxu0 0.0
  %1420 = vmatpush1.msra.mxu0 0.0
  %1421 = vmatprep.subr.mxu0 0.0
  %1422 = vmatpush1.msra.mxu0 0.0
  %1423 = vmatprep.subr.mxu0 0.0
  %1424 = vmatpush1.msra.mxu0 0.0
  %1425 = vmatprep.subr.mxu0 0.0
  %1426 = vmatpush1.msra.mxu0 0.0
  %1427 = vmatprep.subr.mxu0 0.0
  %1428 = vmatpush1.msra.mxu0 0.0
  %1429 = vmatprep.subr.mxu0 0.0
  %1430 = vmatpush1.msra.mxu0 0.0
  %1431 = vmatprep.mubr.f32.mxu0 0.0
  %1432 = vmatmul.mubr.f32.gmra.mrb[0].mxu0 %v1356
  %v1433 = vpop.f32.mrb[0].mxu0
  %v1434 = vadd.f32 0.0, %v1433
  %v1435 = vpop.f32.mrb[0].mxu0
  %1436 = vmatprep.mubr.f32.mxu0 0.0
  %1437 = vmatmul.mubr.f32.gmra.mrb[0].mxu0 %v1359
  %v1438 = vpop.f32.mrb[0].mxu0
  %v1439 = vadd.f32 0.0, %v1438
  %v1440 = vpop.f32.mrb[0].mxu0
  %1441 = vmatprep.mubr.f32.mxu0 0.0
  %1442 = vmatmul.mubr.f32.gmra.mrb[0].mxu0 %v1362
  %v1443 = vpop.f32.mrb[0].mxu0
  %v1444 = vadd.f32 0.0, %v1443
  %v1445 = vpop.f32.mrb[0].mxu0
  %1446 = vmatprep.mubr.f32.mxu0 0.0
  %1447 = vmatmul.mubr.f32.gmra.mrb[0].mxu0 %v1365
  %v1448 = vpop.f32.mrb[0].mxu0
  %v1449 = vadd.f32 0.0, %v1448
  %v1450 = vpop.f32.mrb[0].mxu0
  %1451 = vdwg.mxu0
  %v1452 = vmul.f32 %v1434, 0.015625
  %v1453 = vmul.f32 %v1439, 0.015625
  %v1454 = vmul.f32 %v1444, 0.015625
  %v1455 = vmul.f32 %v1449, 0.015625
  %v1456 = vmul.f32 %v1452, %v645
  %v1457 = vmul.f32 %v1453, %v646
  %v1458 = vmul.f32 %v1454, %v647
  %v1459 = vmul.f32 %v1455, %v648
  %v1460 = vsel %vm56, %v637, 0
  %v1462 = vsel %vm56, %v638, 0
  %v1464 = vsel %vm56, %v639, 0
  %v1466 = vsel %vm56, %v640, 0
  %v1468 = vsel %vm56, %v641, 0
  %v1470 = vsel %vm56, %v642, 0
  %v1472 = vsel %vm56, %v643, 0
  %v1474 = vsel %vm56, %v644, 0
  %1476 = vmatprep.subr.mxu0 0.0
  %1477 = vmatpush1.msra.mxu0 %v1456
  %1478 = vmatprep.subr.mxu0 0.0
  %1479 = vmatpush1.msra.mxu0 %v1457
  %1480 = vmatprep.subr.mxu0 0.0
  %1481 = vmatpush1.msra.mxu0 %v1458
  %1482 = vmatprep.subr.mxu0 0.0
  %1483 = vmatpush1.msra.mxu0 %v1459
  %1484 = vmatprep.subr.mxu0 0.0
  %1485 = vmatpush1.msra.mxu0 0.0
  %1486 = vmatprep.subr.mxu0 0.0
  %1487 = vmatpush1.msra.mxu0 0.0
  %1488 = vmatprep.subr.mxu0 0.0
  %1489 = vmatpush1.msra.mxu0 0.0
  %1490 = vmatprep.subr.mxu0 0.0
  %1491 = vmatpush1.msra.mxu0 0.0
  %1492 = vmatprep.subr.mxu0 0.0
  %1493 = vmatpush1.msra.mxu0 0.0
  %1494 = vmatprep.subr.mxu0 0.0
  %1495 = vmatpush1.msra.mxu0 0.0
  %1496 = vmatprep.subr.mxu0 0.0
  %1497 = vmatpush1.msra.mxu0 0.0
  %1498 = vmatprep.subr.mxu0 0.0
  %1499 = vmatpush1.msra.mxu0 0.0
  %1500 = vmatprep.subr.mxu0 0.0
  %1501 = vmatpush1.msra.mxu0 0.0
  %1502 = vmatprep.subr.mxu0 0.0
  %1503 = vmatpush1.msra.mxu0 0.0
  %1504 = vmatprep.subr.mxu0 0.0
  %1505 = vmatpush1.msra.mxu0 0.0
  %1506 = vmatprep.subr.mxu0 0.0
  %1507 = vmatpush1.msra.mxu0 0.0
  %1508 = vmatprep.subr.mxu0 0.0
  %1509 = vmatpush1.msra.mxu0 0.0
  %1510 = vmatprep.subr.mxu0 0.0
  %1511 = vmatpush1.msra.mxu0 0.0
  %1512 = vmatprep.subr.mxu0 0.0
  %1513 = vmatpush1.msra.mxu0 0.0
  %1514 = vmatprep.subr.mxu0 0.0
  %1515 = vmatpush1.msra.mxu0 0.0
  %1516 = vmatprep.subr.mxu0 0.0
  %1517 = vmatpush1.msra.mxu0 0.0
  %1518 = vmatprep.subr.mxu0 0.0
  %1519 = vmatpush1.msra.mxu0 0.0
  %1520 = vmatprep.subr.mxu0 0.0
  %1521 = vmatpush1.msra.mxu0 0.0
  %1522 = vmatprep.subr.mxu0 0.0
  %1523 = vmatpush1.msra.mxu0 0.0
  %1524 = vmatprep.subr.mxu0 0.0
  %1525 = vmatpush1.msra.mxu0 0.0
  %1526 = vmatprep.subr.mxu0 0.0
  %1527 = vmatpush1.msra.mxu0 0.0
  %1528 = vmatprep.subr.mxu0 0.0
  %1529 = vmatpush1.msra.mxu0 0.0
  %1530 = vmatprep.subr.mxu0 0.0
  %1531 = vmatpush1.msra.mxu0 0.0
  %1532 = vmatprep.subr.mxu0 0.0
  %1533 = vmatpush1.msra.mxu0 0.0
  %1534 = vmatprep.subr.mxu0 0.0
  %1535 = vmatpush1.msra.mxu0 0.0
  %1536 = vmatprep.subr.mxu0 0.0
  %1537 = vmatpush1.msra.mxu0 0.0
  %1538 = vmatprep.subr.mxu0 0.0
  %1539 = vmatpush1.msra.mxu0 0.0
  %1540 = vmatprep.mubr.f32.mxu0 0.0
  %1541 = vmatmul.mubr.f32.gmra.mrb[0].mxu0 %v1460
  %v1542 = vpop.f32.mrb[0].mxu0
  %v1543 = vadd.f32 0.0, %v1542
  %v1544 = vpop.f32.mrb[0].mxu0
  %1545 = vmatprep.mubr.f32.mxu0 0.0
  %1546 = vmatmul.mubr.f32.gmra.mrb[0].mxu0 %v1462
  %v1547 = vpop.f32.mrb[0].mxu0
  %v1548 = vadd.f32 0.0, %v1547
  %v1549 = vpop.f32.mrb[0].mxu0
  %1550 = vmatprep.mubr.f32.mxu0 0.0
  %1551 = vmatmul.mubr.f32.gmra.mrb[0].mxu0 %v1464
  %v1552 = vpop.f32.mrb[0].mxu0
  %v1553 = vadd.f32 0.0, %v1552
  %v1554 = vpop.f32.mrb[0].mxu0
  %1555 = vmatprep.mubr.f32.mxu0 0.0
  %1556 = vmatmul.mubr.f32.gmra.mrb[0].mxu0 %v1466
  %v1557 = vpop.f32.mrb[0].mxu0
  %v1558 = vadd.f32 0.0, %v1557
  %v1559 = vpop.f32.mrb[0].mxu0
  %1560 = vmatprep.mubr.f32.mxu0 0.0
  %1561 = vmatmul.mubr.f32.gmra.mrb[0].mxu0 %v1468
  %v1562 = vpop.f32.mrb[0].mxu0
  %v1563 = vadd.f32 0.0, %v1562
  %v1564 = vpop.f32.mrb[0].mxu0
  %1565 = vmatprep.mubr.f32.mxu0 0.0
  %1566 = vmatmul.mubr.f32.gmra.mrb[0].mxu0 %v1470
  %v1567 = vpop.f32.mrb[0].mxu0
  %v1568 = vadd.f32 0.0, %v1567
  %v1569 = vpop.f32.mrb[0].mxu0
  %1570 = vmatprep.mubr.f32.mxu0 0.0
  %1571 = vmatmul.mubr.f32.gmra.mrb[0].mxu0 %v1472
  %v1572 = vpop.f32.mrb[0].mxu0
  %v1573 = vadd.f32 0.0, %v1572
  %v1574 = vpop.f32.mrb[0].mxu0
  %1575 = vmatprep.mubr.f32.mxu0 0.0
  %1576 = vmatmul.mubr.f32.gmra.mrb[0].mxu0 %v1474
  %v1577 = vpop.f32.mrb[0].mxu0
  %v1578 = vadd.f32 0.0, %v1577
  %v1579 = vpop.f32.mrb[0].mxu0
  %1580 = vdwg.mxu0
  %v1581 = vmul.f32 %v1543, %v1283
  %v1582 = vmul.f32 %v1548, %v1284
  %v1583 = vmul.f32 %v1553, %v1285
  %v1584 = vmul.f32 %v1558, %v1286
  %v1585 = vmul.f32 %v1563, %v1287
  %v1586 = vmul.f32 %v1568, %v1288
  %v1587 = vmul.f32 %v1573, %v1289
  %v1588 = vmul.f32 %v1578, %v1290
  %v1589 = vld [vmem:[%s7] sm:$0x1]
  %v1590 = vlaneseq
  %v1591 = vshrl.u32 %v1590, 7
  %v1592 = vsub.s32 0, %v1591
  %v1593 = vrot.slane %v1589, %v1592
  %v1594 = vmul.f32 %v29, %v1593
  %v1595 = vmul.f32 %v30, %v1593
  %v1596 = vmul.f32 %v31, %v1593
  %v1597 = vmul.f32 %v32, %v1593
  %v1598 = vmul.f32 %v33, %v1593
  %v1599 = vmul.f32 %v34, %v1593
  %v1600 = vmul.f32 %v35, %v1593
  %v1601 = vmul.f32 %v36, %v1593
  %v1602 = vmul.f32 %v37, %v1593
  %v1603 = vmul.f32 %v38, %v1593
  %v1604 = vmul.f32 %v39, %v1593
  %v1605 = vmul.f32 %v40, %v1593
  %v1606 = vmul.f32 %v41, %v1593
  %v1607 = vmul.f32 %v42, %v1593
  %v1608 = vmul.f32 %v43, %v1593
  %v1609 = vmul.f32 %v44, %v1593
  %v1610 = vld [vmem:[%s7 + $0x1] sm:$0x1]
  %v1611 = vlaneseq
  %v1612 = vshrl.u32 %v1611, 7
  %v1613 = vsub.s32 0, %v1612
  %v1614 = vrot.slane %v1610, %v1613
  %v1615 = vmul.f32 %v29, %v1614
  %v1616 = vmul.f32 %v30, %v1614
  %v1617 = vmul.f32 %v31, %v1614
  %v1618 = vmul.f32 %v32, %v1614
  %v1619 = vmul.f32 %v33, %v1614
  %v1620 = vmul.f32 %v34, %v1614
  %v1621 = vmul.f32 %v35, %v1614
  %v1622 = vmul.f32 %v36, %v1614
  %v1623 = vmul.f32 %v37, %v1614
  %v1624 = vmul.f32 %v38, %v1614
  %v1625 = vmul.f32 %v39, %v1614
  %v1626 = vmul.f32 %v40, %v1614
  %v1627 = vmul.f32 %v41, %v1614
  %v1628 = vmul.f32 %v42, %v1614
  %v1629 = vmul.f32 %v43, %v1614
  %v1630 = vmul.f32 %v44, %v1614
  %v1631 = vld [vmem:[%s7 + $0x2] sm:$0x1]
  %v1632 = vlaneseq
  %v1633 = vshrl.u32 %v1632, 7
  %v1634 = vsub.s32 0, %v1633
  %v1635 = vrot.slane %v1631, %v1634
  %v1636 = vmul.f32 %v29, %v1635
  %v1637 = vmul.f32 %v30, %v1635
  %v1638 = vmul.f32 %v31, %v1635
  %v1639 = vmul.f32 %v32, %v1635
  %v1640 = vmul.f32 %v33, %v1635
  %v1641 = vmul.f32 %v34, %v1635
  %v1642 = vmul.f32 %v35, %v1635
  %v1643 = vmul.f32 %v36, %v1635
  %v1644 = vmul.f32 %v37, %v1635
  %v1645 = vmul.f32 %v38, %v1635
  %v1646 = vmul.f32 %v39, %v1635
  %v1647 = vmul.f32 %v40, %v1635
  %v1648 = vmul.f32 %v41, %v1635
  %v1649 = vmul.f32 %v42, %v1635
  %v1650 = vmul.f32 %v43, %v1635
  %v1651 = vmul.f32 %v44, %v1635
  %v1652 = vld [vmem:[%s7 + $0x3] sm:$0x1]
  %v1653 = vlaneseq
  %v1654 = vshrl.u32 %v1653, 7
  %v1655 = vsub.s32 0, %v1654
  %v1656 = vrot.slane %v1652, %v1655
  %v1657 = vmul.f32 %v29, %v1656
  %v1658 = vmul.f32 %v30, %v1656
  %v1659 = vmul.f32 %v31, %v1656
  %v1660 = vmul.f32 %v32, %v1656
  %v1661 = vmul.f32 %v33, %v1656
  %v1662 = vmul.f32 %v34, %v1656
  %v1663 = vmul.f32 %v35, %v1656
  %v1664 = vmul.f32 %v36, %v1656
  %v1665 = vmul.f32 %v37, %v1656
  %v1666 = vmul.f32 %v38, %v1656
  %v1667 = vmul.f32 %v39, %v1656
  %v1668 = vmul.f32 %v40, %v1656
  %v1669 = vmul.f32 %v41, %v1656
  %v1670 = vmul.f32 %v42, %v1656
  %v1671 = vmul.f32 %v43, %v1656
  %v1672 = vmul.f32 %v44, %v1656
  %v1673 = vld [vmem:[%s7 + $0x4] sm:$0x1]
  %v1674 = vlaneseq
  %v1675 = vshrl.u32 %v1674, 7
  %v1676 = vsub.s32 0, %v1675
  %v1677 = vrot.slane %v1673, %v1676
  %v1678 = vmul.f32 %v29, %v1677
  %v1679 = vmul.f32 %v30, %v1677
  %v1680 = vmul.f32 %v31, %v1677
  %v1681 = vmul.f32 %v32, %v1677
  %v1682 = vmul.f32 %v33, %v1677
  %v1683 = vmul.f32 %v34, %v1677
  %v1684 = vmul.f32 %v35, %v1677
  %v1685 = vmul.f32 %v36, %v1677
  %v1686 = vmul.f32 %v37, %v1677
  %v1687 = vmul.f32 %v38, %v1677
  %v1688 = vmul.f32 %v39, %v1677
  %v1689 = vmul.f32 %v40, %v1677
  %v1690 = vmul.f32 %v41, %v1677
  %v1691 = vmul.f32 %v42, %v1677
  %v1692 = vmul.f32 %v43, %v1677
  %v1693 = vmul.f32 %v44, %v1677
  %v1694 = vld [vmem:[%s7 + $0x5] sm:$0x1]
  %v1695 = vlaneseq
  %v1696 = vshrl.u32 %v1695, 7
  %v1697 = vsub.s32 0, %v1696
  %v1698 = vrot.slane %v1694, %v1697
  %v1699 = vmul.f32 %v29, %v1698
  %v1700 = vmul.f32 %v30, %v1698
  %v1701 = vmul.f32 %v31, %v1698
  %v1702 = vmul.f32 %v32, %v1698
  %v1703 = vmul.f32 %v33, %v1698
  %v1704 = vmul.f32 %v34, %v1698
  %v1705 = vmul.f32 %v35, %v1698
  %v1706 = vmul.f32 %v36, %v1698
  %v1707 = vmul.f32 %v37, %v1698
  %v1708 = vmul.f32 %v38, %v1698
  %v1709 = vmul.f32 %v39, %v1698
  %v1710 = vmul.f32 %v40, %v1698
  %v1711 = vmul.f32 %v41, %v1698
  %v1712 = vmul.f32 %v42, %v1698
  %v1713 = vmul.f32 %v43, %v1698
  %v1714 = vmul.f32 %v44, %v1698
  %v1715 = vld [vmem:[%s7 + $0x6] sm:$0x1]
  %v1716 = vlaneseq
  %v1717 = vshrl.u32 %v1716, 7
  %v1718 = vsub.s32 0, %v1717
  %v1719 = vrot.slane %v1715, %v1718
  %v1720 = vmul.f32 %v29, %v1719
  %v1721 = vmul.f32 %v30, %v1719
  %v1722 = vmul.f32 %v31, %v1719
  %v1723 = vmul.f32 %v32, %v1719
  %v1724 = vmul.f32 %v33, %v1719
  %v1725 = vmul.f32 %v34, %v1719
  %v1726 = vmul.f32 %v35, %v1719
  %v1727 = vmul.f32 %v36, %v1719
  %v1728 = vmul.f32 %v37, %v1719
  %v1729 = vmul.f32 %v38, %v1719
  %v1730 = vmul.f32 %v39, %v1719
  %v1731 = vmul.f32 %v40, %v1719
  %v1732 = vmul.f32 %v41, %v1719
  %v1733 = vmul.f32 %v42, %v1719
  %v1734 = vmul.f32 %v43, %v1719
  %v1735 = vmul.f32 %v44, %v1719
  %v1736 = vld [vmem:[%s7 + $0x7] sm:$0x1]
  %v1737 = vlaneseq
  %v1738 = vshrl.u32 %v1737, 7
  %v1739 = vsub.s32 0, %v1738
  %v1740 = vrot.slane %v1736, %v1739
  %v1741 = vmul.f32 %v29, %v1740
  %v1742 = vmul.f32 %v30, %v1740
  %v1743 = vmul.f32 %v31, %v1740
  %v1744 = vmul.f32 %v32, %v1740
  %v1745 = vmul.f32 %v33, %v1740
  %v1746 = vmul.f32 %v34, %v1740
  %v1747 = vmul.f32 %v35, %v1740
  %v1748 = vmul.f32 %v36, %v1740
  %v1749 = vmul.f32 %v37, %v1740
  %v1750 = vmul.f32 %v38, %v1740
  %v1751 = vmul.f32 %v39, %v1740
  %v1752 = vmul.f32 %v40, %v1740
  %v1753 = vmul.f32 %v41, %v1740
  %v1754 = vmul.f32 %v42, %v1740
  %v1755 = vmul.f32 %v43, %v1740
  %v1756 = vmul.f32 %v44, %v1740
  %v1757 = vld [vmem:[%s7 + $0x8] sm:$0x1]
  %v1758 = vlaneseq
  %v1759 = vshrl.u32 %v1758, 7
  %v1760 = vsub.s32 0, %v1759
  %v1761 = vrot.slane %v1757, %v1760
  %v1762 = vmul.f32 %v29, %v1761
  %v1763 = vmul.f32 %v30, %v1761
  %v1764 = vmul.f32 %v31, %v1761
  %v1765 = vmul.f32 %v32, %v1761
  %v1766 = vmul.f32 %v33, %v1761
  %v1767 = vmul.f32 %v34, %v1761
  %v1768 = vmul.f32 %v35, %v1761
  %v1769 = vmul.f32 %v36, %v1761
  %v1770 = vmul.f32 %v37, %v1761
  %v1771 = vmul.f32 %v38, %v1761
  %v1772 = vmul.f32 %v39, %v1761
  %v1773 = vmul.f32 %v40, %v1761
  %v1774 = vmul.f32 %v41, %v1761
  %v1775 = vmul.f32 %v42, %v1761
  %v1776 = vmul.f32 %v43, %v1761
  %v1777 = vmul.f32 %v44, %v1761
  %v1778 = vld [vmem:[%s6] sm:$0xff]
  %v1779 = vld [vmem:[%s6 + $0x8] sm:$0xff]
  %v1780 = vld [vmem:[%s6 + $0x10] sm:$0xff]
  %v1781 = vld [vmem:[%s6 + $0x18] sm:$0xff]
  %v1782 = vld [vmem:[%s6 + $0x20] sm:$0xff]
  %v1783 = vld [vmem:[%s6 + $0x28] sm:$0xff]
  %v1784 = vld [vmem:[%s6 + $0x30] sm:$0xff]
  %v1785 = vld [vmem:[%s6 + $0x38] sm:$0xff]
  %v1786 = vld [vmem:[%s6 + $0x40] sm:$0xff]
  %v1787 = vld [vmem:[%s6 + $0x48] sm:$0xff]
  %v1788 = vld [vmem:[%s6 + $0x50] sm:$0xff]
  %v1789 = vld [vmem:[%s6 + $0x58] sm:$0xff]
  %v1790 = vld [vmem:[%s6 + $0x60] sm:$0xff]
  %v1791 = vld [vmem:[%s6 + $0x68] sm:$0xff]
  %v1792 = vld [vmem:[%s6 + $0x70] sm:$0xff]
  %v1793 = vld [vmem:[%s6 + $0x78] sm:$0xff]
  %v1794 = vld [vmem:[%s6 + $0x80] sm:$0xff]
  %v1795 = vld [vmem:[%s6 + $0x88] sm:$0xff]
  %v1796 = vld [vmem:[%s6 + $0x90] sm:$0xff]
  %v1797 = vld [vmem:[%s6 + $0x98] sm:$0xff]
  %v1798 = vld [vmem:[%s6 + $0xa0] sm:$0xff]
  %v1799 = vld [vmem:[%s6 + $0xa8] sm:$0xff]
  %v1800 = vld [vmem:[%s6 + $0xb0] sm:$0xff]
  %v1801 = vld [vmem:[%s6 + $0xb8] sm:$0xff]
  %v1802 = vld [vmem:[%s6 + $0xc0] sm:$0xff]
  %v1803 = vld [vmem:[%s6 + $0xc8] sm:$0xff]
  %v1804 = vld [vmem:[%s6 + $0xd0] sm:$0xff]
  %v1805 = vld [vmem:[%s6 + $0xd8] sm:$0xff]
  %v1806 = vld [vmem:[%s6 + $0xe0] sm:$0xff]
  %v1807 = vld [vmem:[%s6 + $0xe8] sm:$0xff]
  %v1808 = vld [vmem:[%s6 + $0xf0] sm:$0xff]
  %v1809 = vld [vmem:[%s6 + $0xf8] sm:$0xff]
  %v1810 = vld [vmem:[%s6 + $0x100] sm:$0xff]
  %v1811 = vld [vmem:[%s6 + $0x108] sm:$0xff]
  %v1812 = vld [vmem:[%s6 + $0x110] sm:$0xff]
  %v1813 = vld [vmem:[%s6 + $0x118] sm:$0xff]
  %v1814 = vld [vmem:[%s6 + $0x120] sm:$0xff]
  %v1815 = vld [vmem:[%s6 + $0x128] sm:$0xff]
  %v1816 = vld [vmem:[%s6 + $0x130] sm:$0xff]
  %v1817 = vld [vmem:[%s6 + $0x138] sm:$0xff]
  %v1818 = vld [vmem:[%s6 + $0x140] sm:$0xff]
  %v1819 = vld [vmem:[%s6 + $0x148] sm:$0xff]
  %v1820 = vld [vmem:[%s6 + $0x150] sm:$0xff]
  %v1821 = vld [vmem:[%s6 + $0x158] sm:$0xff]
  %v1822 = vld [vmem:[%s6 + $0x160] sm:$0xff]
  %v1823 = vld [vmem:[%s6 + $0x168] sm:$0xff]
  %v1824 = vld [vmem:[%s6 + $0x170] sm:$0xff]
  %v1825 = vld [vmem:[%s6 + $0x178] sm:$0xff]
  %v1826 = vld [vmem:[%s6 + $0x180] sm:$0xff]
  %v1827 = vld [vmem:[%s6 + $0x188] sm:$0xff]
  %v1828 = vld [vmem:[%s6 + $0x190] sm:$0xff]
  %v1829 = vld [vmem:[%s6 + $0x198] sm:$0xff]
  %v1830 = vld [vmem:[%s6 + $0x1a0] sm:$0xff]
  %v1831 = vld [vmem:[%s6 + $0x1a8] sm:$0xff]
  %v1832 = vld [vmem:[%s6 + $0x1b0] sm:$0xff]
  %v1833 = vld [vmem:[%s6 + $0x1b8] sm:$0xff]
  %v1834 = vld [vmem:[%s6 + $0x1c0] sm:$0xff]
  %v1835 = vld [vmem:[%s6 + $0x1c8] sm:$0xff]
  %v1836 = vld [vmem:[%s6 + $0x1d0] sm:$0xff]
  %v1837 = vld [vmem:[%s6 + $0x1d8] sm:$0xff]
  %v1838 = vld [vmem:[%s6 + $0x1e0] sm:$0xff]
  %v1839 = vld [vmem:[%s6 + $0x1e8] sm:$0xff]
  %v1840 = vld [vmem:[%s6 + $0x1f0] sm:$0xff]
  %v1841 = vld [vmem:[%s6 + $0x1f8] sm:$0xff]
  %v1842 = vld [vmem:[%s6 + $0x200] sm:$0xff]
  %v1843 = vld [vmem:[%s6 + $0x208] sm:$0xff]
  %v1844 = vld [vmem:[%s6 + $0x210] sm:$0xff]
  %v1845 = vld [vmem:[%s6 + $0x218] sm:$0xff]
  %v1846 = vld [vmem:[%s6 + $0x220] sm:$0xff]
  %v1847 = vld [vmem:[%s6 + $0x228] sm:$0xff]
  %v1848 = vld [vmem:[%s6 + $0x230] sm:$0xff]
  %v1849 = vld [vmem:[%s6 + $0x238] sm:$0xff]
  %v1850 = vld [vmem:[%s6 + $0x240] sm:$0xff]
  %v1851 = vld [vmem:[%s6 + $0x248] sm:$0xff]
  %v1852 = vld [vmem:[%s6 + $0x250] sm:$0xff]
  %v1853 = vld [vmem:[%s6 + $0x258] sm:$0xff]
  %v1854 = vld [vmem:[%s6 + $0x260] sm:$0xff]
  %v1855 = vld [vmem:[%s6 + $0x268] sm:$0xff]
  %v1856 = vld [vmem:[%s6 + $0x270] sm:$0xff]
  %v1857 = vld [vmem:[%s6 + $0x278] sm:$0xff]
  %v1858 = vld [vmem:[%s6 + $0x280] sm:$0xff]
  %v1859 = vld [vmem:[%s6 + $0x288] sm:$0xff]
  %v1860 = vld [vmem:[%s6 + $0x290] sm:$0xff]
  %v1861 = vld [vmem:[%s6 + $0x298] sm:$0xff]
  %v1862 = vld [vmem:[%s6 + $0x2a0] sm:$0xff]
  %v1863 = vld [vmem:[%s6 + $0x2a8] sm:$0xff]
  %v1864 = vld [vmem:[%s6 + $0x2b0] sm:$0xff]
  %v1865 = vld [vmem:[%s6 + $0x2b8] sm:$0xff]
  %v1866 = vld [vmem:[%s6 + $0x2c0] sm:$0xff]
  %v1867 = vld [vmem:[%s6 + $0x2c8] sm:$0xff]
  %v1868 = vld [vmem:[%s6 + $0x2d0] sm:$0xff]
  %v1869 = vld [vmem:[%s6 + $0x2d8] sm:$0xff]
  %v1870 = vld [vmem:[%s6 + $0x2e0] sm:$0xff]
  %v1871 = vld [vmem:[%s6 + $0x2e8] sm:$0xff]
  %v1872 = vld [vmem:[%s6 + $0x2f0] sm:$0xff]
  %v1873 = vld [vmem:[%s6 + $0x2f8] sm:$0xff]
  %v1874 = vld [vmem:[%s6 + $0x300] sm:$0xff]
  %v1875 = vld [vmem:[%s6 + $0x308] sm:$0xff]
  %v1876 = vld [vmem:[%s6 + $0x310] sm:$0xff]
  %v1877 = vld [vmem:[%s6 + $0x318] sm:$0xff]
  %v1878 = vld [vmem:[%s6 + $0x320] sm:$0xff]
  %v1879 = vld [vmem:[%s6 + $0x328] sm:$0xff]
  %v1880 = vld [vmem:[%s6 + $0x330] sm:$0xff]
  %v1881 = vld [vmem:[%s6 + $0x338] sm:$0xff]
  %v1882 = vld [vmem:[%s6 + $0x340] sm:$0xff]
  %v1883 = vld [vmem:[%s6 + $0x348] sm:$0xff]
  %v1884 = vld [vmem:[%s6 + $0x350] sm:$0xff]
  %v1885 = vld [vmem:[%s6 + $0x358] sm:$0xff]
  %v1886 = vld [vmem:[%s6 + $0x360] sm:$0xff]
  %v1887 = vld [vmem:[%s6 + $0x368] sm:$0xff]
  %v1888 = vld [vmem:[%s6 + $0x370] sm:$0xff]
  %v1889 = vld [vmem:[%s6 + $0x378] sm:$0xff]
  %v1890 = vld [vmem:[%s6 + $0x380] sm:$0xff]
  %v1891 = vld [vmem:[%s6 + $0x388] sm:$0xff]
  %v1892 = vld [vmem:[%s6 + $0x390] sm:$0xff]
  %v1893 = vld [vmem:[%s6 + $0x398] sm:$0xff]
  %v1894 = vld [vmem:[%s6 + $0x3a0] sm:$0xff]
  %v1895 = vld [vmem:[%s6 + $0x3a8] sm:$0xff]
  %v1896 = vld [vmem:[%s6 + $0x3b0] sm:$0xff]
  %v1897 = vld [vmem:[%s6 + $0x3b8] sm:$0xff]
  %v1898 = vld [vmem:[%s6 + $0x3c0] sm:$0xff]
  %v1899 = vld [vmem:[%s6 + $0x3c8] sm:$0xff]
  %v1900 = vld [vmem:[%s6 + $0x3d0] sm:$0xff]
  %v1901 = vld [vmem:[%s6 + $0x3d8] sm:$0xff]
  %v1902 = vld [vmem:[%s6 + $0x3e0] sm:$0xff]
  %v1903 = vld [vmem:[%s6 + $0x3e8] sm:$0xff]
  %v1904 = vld [vmem:[%s6 + $0x3f0] sm:$0xff]
  %v1905 = vld [vmem:[%s6 + $0x3f8] sm:$0xff]
  %v1906 = vld [vmem:[%s6 + $0x400] sm:$0xff]
  %v1907 = vld [vmem:[%s6 + $0x408] sm:$0xff]
  %v1908 = vld [vmem:[%s6 + $0x410] sm:$0xff]
  %v1909 = vld [vmem:[%s6 + $0x418] sm:$0xff]
  %v1910 = vld [vmem:[%s6 + $0x420] sm:$0xff]
  %v1911 = vld [vmem:[%s6 + $0x428] sm:$0xff]
  %v1912 = vld [vmem:[%s6 + $0x430] sm:$0xff]
  %v1913 = vld [vmem:[%s6 + $0x438] sm:$0xff]
  %v1914 = vld [vmem:[%s6 + $0x440] sm:$0xff]
  %v1915 = vld [vmem:[%s6 + $0x448] sm:$0xff]
  %v1916 = vld [vmem:[%s6 + $0x450] sm:$0xff]
  %v1917 = vld [vmem:[%s6 + $0x458] sm:$0xff]
  %v1918 = vld [vmem:[%s6 + $0x460] sm:$0xff]
  %v1919 = vld [vmem:[%s6 + $0x468] sm:$0xff]
  %v1920 = vld [vmem:[%s6 + $0x470] sm:$0xff]
  %v1921 = vld [vmem:[%s6 + $0x478] sm:$0xff]
  %1922 = vmatprep.subr.mxu0 0.0
  %1923 = vmatpush1.msra.mxu0 %v1594
  %1924 = vmatprep.subr.mxu0 0.0
  %1925 = vmatpush1.msra.mxu0 %v1595
  %1926 = vmatprep.subr.mxu0 0.0
  %1927 = vmatpush1.msra.mxu0 %v1596
  %1928 = vmatprep.subr.mxu0 0.0
  %1929 = vmatpush1.msra.mxu0 %v1597
  %1930 = vmatprep.subr.mxu0 0.0
  %1931 = vmatpush1.msra.mxu0 %v1598
  %1932 = vmatprep.subr.mxu0 0.0
  %1933 = vmatpush1.msra.mxu0 %v1599
  %1934 = vmatprep.subr.mxu0 0.0
  %1935 = vmatpush1.msra.mxu0 %v1600
  %1936 = vmatprep.subr.mxu0 0.0
  %1937 = vmatpush1.msra.mxu0 %v1601
  %1938 = vmatprep.subr.mxu0 0.0
  %1939 = vmatpush1.msra.mxu0 %v1602
  %1940 = vmatprep.subr.mxu0 0.0
  %1941 = vmatpush1.msra.mxu0 %v1603
  %1942 = vmatprep.subr.mxu0 0.0
  %1943 = vmatpush1.msra.mxu0 %v1604
  %1944 = vmatprep.subr.mxu0 0.0
  %1945 = vmatpush1.msra.mxu0 %v1605
  %1946 = vmatprep.subr.mxu0 0.0
  %1947 = vmatpush1.msra.mxu0 %v1606
  %1948 = vmatprep.subr.mxu0 0.0
  %1949 = vmatpush1.msra.mxu0 %v1607
  %1950 = vmatprep.subr.mxu0 0.0
  %1951 = vmatpush1.msra.mxu0 %v1608
  %1952 = vmatprep.subr.mxu0 0.0
  %1953 = vmatpush1.msra.mxu0 %v1609
  %1954 = vmatprep.subr.mxu0 0.0
  %1955 = vmatpush1.msra.mxu0 %v1615
  %1956 = vmatprep.subr.mxu0 0.0
  %1957 = vmatpush1.msra.mxu0 %v1616
  %1958 = vmatprep.subr.mxu0 0.0
  %1959 = vmatpush1.msra.mxu0 %v1617
  %1960 = vmatprep.subr.mxu0 0.0
  %1961 = vmatpush1.msra.mxu0 %v1618
  %1962 = vmatprep.subr.mxu0 0.0
  %1963 = vmatpush1.msra.mxu0 %v1619
  %1964 = vmatprep.subr.mxu0 0.0
  %1965 = vmatpush1.msra.mxu0 %v1620
  %1966 = vmatprep.subr.mxu0 0.0
  %1967 = vmatpush1.msra.mxu0 %v1621
  %1968 = vmatprep.subr.mxu0 0.0
  %1969 = vmatpush1.msra.mxu0 %v1622
  %1970 = vmatprep.subr.mxu0 0.0
  %1971 = vmatpush1.msra.mxu0 %v1623
  %1972 = vmatprep.subr.mxu0 0.0
  %1973 = vmatpush1.msra.mxu0 %v1624
  %1974 = vmatprep.subr.mxu0 0.0
  %1975 = vmatpush1.msra.mxu0 %v1625
  %1976 = vmatprep.subr.mxu0 0.0
  %1977 = vmatpush1.msra.mxu0 %v1626
  %1978 = vmatprep.subr.mxu0 0.0
  %1979 = vmatpush1.msra.mxu0 %v1627
  %1980 = vmatprep.subr.mxu0 0.0
  %1981 = vmatpush1.msra.mxu0 %v1628
  %1982 = vmatprep.subr.mxu0 0.0
  %1983 = vmatpush1.msra.mxu0 %v1629
  %1984 = vmatprep.subr.mxu0 0.0
  %1985 = vmatpush1.msra.mxu0 %v1630
  %1986 = vmatprep.mubr.f32.mxu0 %v1779
  %1987 = vmatmul.mubr.f32.gmra.mrb[0].mxu0 %v1778
  %v1988 = vpop.f32.mrb[0].mxu0
  %v1989 = vadd.f32 0.0, %v1988
  %v1990 = vpop.f32.mrb[0].mxu0
  %1991 = vmatprep.mubr.f32.mxu0 %v1788
  %1992 = vmatmul.mubr.f32.gmra.mrb[0].mxu0 %v1787
  %v1993 = vpop.f32.mrb[0].mxu0
  %v1994 = vadd.f32 0.0, %v1993
  %v1995 = vpop.f32.mrb[0].mxu0
  %1996 = vmatprep.mubr.f32.mxu0 %v1797
  %1997 = vmatmul.mubr.f32.gmra.mrb[0].mxu0 %v1796
  %v1998 = vpop.f32.mrb[0].mxu0
  %v1999 = vadd.f32 0.0, %v1998
  %v2000 = vpop.f32.mrb[0].mxu0
  %2001 = vmatprep.mubr.f32.mxu0 %v1806
  %2002 = vmatmul.mubr.f32.gmra.mrb[0].mxu0 %v1805
  %v2003 = vpop.f32.mrb[0].mxu0
  %v2004 = vadd.f32 0.0, %v2003
  %v2005 = vpop.f32.mrb[0].mxu0
  %2006 = vmatprep.mubr.f32.mxu0 %v1815
  %2007 = vmatmul.mubr.f32.gmra.mrb[0].mxu0 %v1814
  %v2008 = vpop.f32.mrb[0].mxu0
  %v2009 = vadd.f32 0.0, %v2008
  %v2010 = vpop.f32.mrb[0].mxu0
  %2011 = vmatprep.mubr.f32.mxu0 %v1824
  %2012 = vmatmul.mubr.f32.gmra.mrb[0].mxu0 %v1823
  %v2013 = vpop.f32.mrb[0].mxu0
  %v2014 = vadd.f32 0.0, %v2013
  %v2015 = vpop.f32.mrb[0].mxu0
  %2016 = vmatprep.mubr.f32.mxu0 %v1833
  %2017 = vmatmul.mubr.f32.gmra.mrb[0].mxu0 %v1832
  %v2018 = vpop.f32.mrb[0].mxu0
  %v2019 = vadd.f32 0.0, %v2018
  %v2020 = vpop.f32.mrb[0].mxu0
  %2021 = vmatprep.mubr.f32.mxu0 %v1842
  %2022 = vmatmul.mubr.f32.gmra.mrb[0].mxu0 %v1841
  %v2023 = vpop.f32.mrb[0].mxu0
  %v2024 = vadd.f32 0.0, %v2023
  %v2025 = vpop.f32.mrb[0].mxu0
  %2026 = vmatprep.mubr.f32.mxu0 %v1851
  %2027 = vmatmul.mubr.f32.gmra.mrb[0].mxu0 %v1850
  %v2028 = vpop.f32.mrb[0].mxu0
  %v2029 = vadd.f32 0.0, %v2028
  %v2030 = vpop.f32.mrb[0].mxu0
  %2031 = vmatprep.mubr.f32.mxu0 %v1860
  %2032 = vmatmul.mubr.f32.gmra.mrb[0].mxu0 %v1859
  %v2033 = vpop.f32.mrb[0].mxu0
  %v2034 = vadd.f32 0.0, %v2033
  %v2035 = vpop.f32.mrb[0].mxu0
  %2036 = vmatprep.mubr.f32.mxu0 %v1869
  %2037 = vmatmul.mubr.f32.gmra.mrb[0].mxu0 %v1868
  %v2038 = vpop.f32.mrb[0].mxu0
  %v2039 = vadd.f32 0.0, %v2038
  %v2040 = vpop.f32.mrb[0].mxu0
  %2041 = vmatprep.mubr.f32.mxu0 %v1878
  %2042 = vmatmul.mubr.f32.gmra.mrb[0].mxu0 %v1877
  %v2043 = vpop.f32.mrb[0].mxu0
  %v2044 = vadd.f32 0.0, %v2043
  %v2045 = vpop.f32.mrb[0].mxu0
  %2046 = vmatprep.mubr.f32.mxu0 %v1887
  %2047 = vmatmul.mubr.f32.gmra.mrb[0].mxu0 %v1886
  %v2048 = vpop.f32.mrb[0].mxu0
  %v2049 = vadd.f32 0.0, %v2048
  %v2050 = vpop.f32.mrb[0].mxu0
  %2051 = vmatprep.mubr.f32.mxu0 %v1896
  %2052 = vmatmul.mubr.f32.gmra.mrb[0].mxu0 %v1895
  %v2053 = vpop.f32.mrb[0].mxu0
  %v2054 = vadd.f32 0.0, %v2053
  %v2055 = vpop.f32.mrb[0].mxu0
  %2056 = vmatprep.mubr.f32.mxu0 %v1905
  %2057 = vmatmul.mubr.f32.gmra.mrb[0].mxu0 %v1904
  %v2058 = vpop.f32.mrb[0].mxu0
  %v2059 = vadd.f32 0.0, %v2058
  %v2060 = vpop.f32.mrb[0].mxu0
  %2061 = vmatprep.mubr.f32.mxu0 %v1914
  %2062 = vmatmul.mubr.f32.gmra.mrb[0].mxu0 %v1913
  %v2063 = vpop.f32.mrb[0].mxu0
  %v2064 = vadd.f32 0.0, %v2063
  %v2065 = vpop.f32.mrb[0].mxu0
  %2066 = vdwg.mxu0
  %2067 = vmatprep.subr.mxu0 0.0
  %2068 = vmatpush1.msra.mxu0 %v1636
  %2069 = vmatprep.subr.mxu0 0.0
  %2070 = vmatpush1.msra.mxu0 %v1637
  %2071 = vmatprep.subr.mxu0 0.0
  %2072 = vmatpush1.msra.mxu0 %v1638
  %2073 = vmatprep.subr.mxu0 0.0
  %2074 = vmatpush1.msra.mxu0 %v1639
  %2075 = vmatprep.subr.mxu0 0.0
  %2076 = vmatpush1.msra.mxu0 %v1640
  %2077 = vmatprep.subr.mxu0 0.0
  %2078 = vmatpush1.msra.mxu0 %v1641
  %2079 = vmatprep.subr.mxu0 0.0
  %2080 = vmatpush1.msra.mxu0 %v1642
  %2081 = vmatprep.subr.mxu0 0.0
  %2082 = vmatpush1.msra.mxu0 %v1643
  %2083 = vmatprep.subr.mxu0 0.0
  %2084 = vmatpush1.msra.mxu0 %v1644
  %2085 = vmatprep.subr.mxu0 0.0
  %2086 = vmatpush1.msra.mxu0 %v1645
  %2087 = vmatprep.subr.mxu0 0.0
  %2088 = vmatpush1.msra.mxu0 %v1646
  %2089 = vmatprep.subr.mxu0 0.0
  %2090 = vmatpush1.msra.mxu0 %v1647
  %2091 = vmatprep.subr.mxu0 0.0
  %2092 = vmatpush1.msra.mxu0 %v1648
  %2093 = vmatprep.subr.mxu0 0.0
  %2094 = vmatpush1.msra.mxu0 %v1649
  %2095 = vmatprep.subr.mxu0 0.0
  %2096 = vmatpush1.msra.mxu0 %v1650
  %2097 = vmatprep.subr.mxu0 0.0
  %2098 = vmatpush1.msra.mxu0 %v1651
  %2099 = vmatprep.subr.mxu0 0.0
  %2100 = vmatpush1.msra.mxu0 %v1657
  %2101 = vmatprep.subr.mxu0 0.0
  %2102 = vmatpush1.msra.mxu0 %v1658
  %2103 = vmatprep.subr.mxu0 0.0
  %2104 = vmatpush1.msra.mxu0 %v1659
  %2105 = vmatprep.subr.mxu0 0.0
  %2106 = vmatpush1.msra.mxu0 %v1660
  %2107 = vmatprep.subr.mxu0 0.0
  %2108 = vmatpush1.msra.mxu0 %v1661
  %2109 = vmatprep.subr.mxu0 0.0
  %2110 = vmatpush1.msra.mxu0 %v1662
  %2111 = vmatprep.subr.mxu0 0.0
  %2112 = vmatpush1.msra.mxu0 %v1663
  %2113 = vmatprep.subr.mxu0 0.0
  %2114 = vmatpush1.msra.mxu0 %v1664
  %2115 = vmatprep.subr.mxu0 0.0
  %2116 = vmatpush1.msra.mxu0 %v1665
  %2117 = vmatprep.subr.mxu0 0.0
  %2118 = vmatpush1.msra.mxu0 %v1666
  %2119 = vmatprep.subr.mxu0 0.0
  %2120 = vmatpush1.msra.mxu0 %v1667
  %2121 = vmatprep.subr.mxu0 0.0
  %2122 = vmatpush1.msra.mxu0 %v1668
  %2123 = vmatprep.subr.mxu0 0.0
  %2124 = vmatpush1.msra.mxu0 %v1669
  %2125 = vmatprep.subr.mxu0 0.0
  %2126 = vmatpush1.msra.mxu0 %v1670
  %2127 = vmatprep.subr.mxu0 0.0
  %2128 = vmatpush1.msra.mxu0 %v1671
  %2129 = vmatprep.subr.mxu0 0.0
  %2130 = vmatpush1.msra.mxu0 %v1672
  %2131 = vmatprep.mubr.f32.mxu0 %v1781
  %2132 = vmatmul.mubr.f32.gmra.mrb[0].mxu0 %v1780
  %v2133 = vpop.f32.mrb[0].mxu0
  %v2134 = vadd.f32 %v1989, %v2133
  %v2135 = vpop.f32.mrb[0].mxu0
  %2136 = vmatprep.mubr.f32.mxu0 %v1790
  %2137 = vmatmul.mubr.f32.gmra.mrb[0].mxu0 %v1789
  %v2138 = vpop.f32.mrb[0].mxu0
  %v2139 = vadd.f32 %v1994, %v2138
  %v2140 = vpop.f32.mrb[0].mxu0
  %2141 = vmatprep.mubr.f32.mxu0 %v1799
  %2142 = vmatmul.mubr.f32.gmra.mrb[0].mxu0 %v1798
  %v2143 = vpop.f32.mrb[0].mxu0
  %v2144 = vadd.f32 %v1999, %v2143
  %v2145 = vpop.f32.mrb[0].mxu0
  %2146 = vmatprep.mubr.f32.mxu0 %v1808
  %2147 = vmatmul.mubr.f32.gmra.mrb[0].mxu0 %v1807
  %v2148 = vpop.f32.mrb[0].mxu0
  %v2149 = vadd.f32 %v2004, %v2148
  %v2150 = vpop.f32.mrb[0].mxu0
  %2151 = vmatprep.mubr.f32.mxu0 %v1817
  %2152 = vmatmul.mubr.f32.gmra.mrb[0].mxu0 %v1816
  %v2153 = vpop.f32.mrb[0].mxu0
  %v2154 = vadd.f32 %v2009, %v2153
  %v2155 = vpop.f32.mrb[0].mxu0
  %2156 = vmatprep.mubr.f32.mxu0 %v1826
  %2157 = vmatmul.mubr.f32.gmra.mrb[0].mxu0 %v1825
  %v2158 = vpop.f32.mrb[0].mxu0
  %v2159 = vadd.f32 %v2014, %v2158
  %v2160 = vpop.f32.mrb[0].mxu0
  %2161 = vmatprep.mubr.f32.mxu0 %v1835
  %2162 = vmatmul.mubr.f32.gmra.mrb[0].mxu0 %v1834
  %v2163 = vpop.f32.mrb[0].mxu0
  %v2164 = vadd.f32 %v2019, %v2163
  %v2165 = vpop.f32.mrb[0].mxu0
  %2166 = vmatprep.mubr.f32.mxu0 %v1844
  %2167 = vmatmul.mubr.f32.gmra.mrb[0].mxu0 %v1843
  %v2168 = vpop.f32.mrb[0].mxu0
  %v2169 = vadd.f32 %v2024, %v2168
  %v2170 = vpop.f32.mrb[0].mxu0
  %2171 = vmatprep.mubr.f32.mxu0 %v1853
  %2172 = vmatmul.mubr.f32.gmra.mrb[0].mxu0 %v1852
  %v2173 = vpop.f32.mrb[0].mxu0
  %v2174 = vadd.f32 %v2029, %v2173
  %v2175 = vpop.f32.mrb[0].mxu0
  %2176 = vmatprep.mubr.f32.mxu0 %v1862
  %2177 = vmatmul.mubr.f32.gmra.mrb[0].mxu0 %v1861
  %v2178 = vpop.f32.mrb[0].mxu0
  %v2179 = vadd.f32 %v2034, %v2178
  %v2180 = vpop.f32.mrb[0].mxu0
  %2181 = vmatprep.mubr.f32.mxu0 %v1871
  %2182 = vmatmul.mubr.f32.gmra.mrb[0].mxu0 %v1870
  %v2183 = vpop.f32.mrb[0].mxu0
  %v2184 = vadd.f32 %v2039, %v2183
  %v2185 = vpop.f32.mrb[0].mxu0
  %2186 = vmatprep.mubr.f32.mxu0 %v1880
  %2187 = vmatmul.mubr.f32.gmra.mrb[0].mxu0 %v1879
  %v2188 = vpop.f32.mrb[0].mxu0
  %v2189 = vadd.f32 %v2044, %v2188
  %v2190 = vpop.f32.mrb[0].mxu0
  %2191 = vmatprep.mubr.f32.mxu0 %v1889
  %2192 = vmatmul.mubr.f32.gmra.mrb[0].mxu0 %v1888
  %v2193 = vpop.f32.mrb[0].mxu0
  %v2194 = vadd.f32 %v2049, %v2193
  %v2195 = vpop.f32.mrb[0].mxu0
  %2196 = vmatprep.mubr.f32.mxu0 %v1898
  %2197 = vmatmul.mubr.f32.gmra.mrb[0].mxu0 %v1897
  %v2198 = vpop.f32.mrb[0].mxu0
  %v2199 = vadd.f32 %v2054, %v2198
  %v2200 = vpop.f32.mrb[0].mxu0
  %2201 = vmatprep.mubr.f32.mxu0 %v1907
  %2202 = vmatmul.mubr.f32.gmra.mrb[0].mxu0 %v1906
  %v2203 = vpop.f32.mrb[0].mxu0
  %v2204 = vadd.f32 %v2059, %v2203
  %v2205 = vpop.f32.mrb[0].mxu0
  %2206 = vmatprep.mubr.f32.mxu0 %v1916
  %2207 = vmatmul.mubr.f32.gmra.mrb[0].mxu0 %v1915
  %v2208 = vpop.f32.mrb[0].mxu0
  %v2209 = vadd.f32 %v2064, %v2208
  %v2210 = vpop.f32.mrb[0].mxu0
  %2211 = vdwg.mxu0
  %2212 = vmatprep.subr.mxu0 0.0
  %2213 = vmatpush1.msra.mxu0 %v1678
  %2214 = vmatprep.subr.mxu0 0.0
  %2215 = vmatpush1.msra.mxu0 %v1679
  %2216 = vmatprep.subr.mxu0 0.0
  %2217 = vmatpush1.msra.mxu0 %v1680
  %2218 = vmatprep.subr.mxu0 0.0
  %2219 = vmatpush1.msra.mxu0 %v1681
  %2220 = vmatprep.subr.mxu0 0.0
  %2221 = vmatpush1.msra.mxu0 %v1682
  %2222 = vmatprep.subr.mxu0 0.0
  %2223 = vmatpush1.msra.mxu0 %v1683
  %2224 = vmatprep.subr.mxu0 0.0
  %2225 = vmatpush1.msra.mxu0 %v1684
  %2226 = vmatprep.subr.mxu0 0.0
  %2227 = vmatpush1.msra.mxu0 %v1685
  %2228 = vmatprep.subr.mxu0 0.0
  %2229 = vmatpush1.msra.mxu0 %v1686
  %2230 = vmatprep.subr.mxu0 0.0
  %2231 = vmatpush1.msra.mxu0 %v1687
  %2232 = vmatprep.subr.mxu0 0.0
  %2233 = vmatpush1.msra.mxu0 %v1688
  %2234 = vmatprep.subr.mxu0 0.0
  %2235 = vmatpush1.msra.mxu0 %v1689
  %2236 = vmatprep.subr.mxu0 0.0
  %2237 = vmatpush1.msra.mxu0 %v1690
  %2238 = vmatprep.subr.mxu0 0.0
  %2239 = vmatpush1.msra.mxu0 %v1691
  %2240 = vmatprep.subr.mxu0 0.0
  %2241 = vmatpush1.msra.mxu0 %v1692
  %2242 = vmatprep.subr.mxu0 0.0
  %2243 = vmatpush1.msra.mxu0 %v1693
  %2244 = vmatprep.subr.mxu0 0.0
  %2245 = vmatpush1.msra.mxu0 %v1699
  %2246 = vmatprep.subr.mxu0 0.0
  %2247 = vmatpush1.msra.mxu0 %v1700
  %2248 = vmatprep.subr.mxu0 0.0
  %2249 = vmatpush1.msra.mxu0 %v1701
  %2250 = vmatprep.subr.mxu0 0.0
  %2251 = vmatpush1.msra.mxu0 %v1702
  %2252 = vmatprep.subr.mxu0 0.0
  %2253 = vmatpush1.msra.mxu0 %v1703
  %2254 = vmatprep.subr.mxu0 0.0
  %2255 = vmatpush1.msra.mxu0 %v1704
  %2256 = vmatprep.subr.mxu0 0.0
  %2257 = vmatpush1.msra.mxu0 %v1705
  %2258 = vmatprep.subr.mxu0 0.0
  %2259 = vmatpush1.msra.mxu0 %v1706
  %2260 = vmatprep.subr.mxu0 0.0
  %2261 = vmatpush1.msra.mxu0 %v1707
  %2262 = vmatprep.subr.mxu0 0.0
  %2263 = vmatpush1.msra.mxu0 %v1708
  %2264 = vmatprep.subr.mxu0 0.0
  %2265 = vmatpush1.msra.mxu0 %v1709
  %2266 = vmatprep.subr.mxu0 0.0
  %2267 = vmatpush1.msra.mxu0 %v1710
  %2268 = vmatprep.subr.mxu0 0.0
  %2269 = vmatpush1.msra.mxu0 %v1711
  %2270 = vmatprep.subr.mxu0 0.0
  %2271 = vmatpush1.msra.mxu0 %v1712
  %2272 = vmatprep.subr.mxu0 0.0
  %2273 = vmatpush1.msra.mxu0 %v1713
  %2274 = vmatprep.subr.mxu0 0.0
  %2275 = vmatpush1.msra.mxu0 %v1714
  %2276 = vmatprep.mubr.f32.mxu0 %v1783
  %2277 = vmatmul.mubr.f32.gmra.mrb[0].mxu0 %v1782
  %v2278 = vpop.f32.mrb[0].mxu0
  %v2279 = vadd.f32 %v2134, %v2278
  %v2280 = vpop.f32.mrb[0].mxu0
  %2281 = vmatprep.mubr.f32.mxu0 %v1792
  %2282 = vmatmul.mubr.f32.gmra.mrb[0].mxu0 %v1791
  %v2283 = vpop.f32.mrb[0].mxu0
  %v2284 = vadd.f32 %v2139, %v2283
  %v2285 = vpop.f32.mrb[0].mxu0
  %2286 = vmatprep.mubr.f32.mxu0 %v1801
  %2287 = vmatmul.mubr.f32.gmra.mrb[0].mxu0 %v1800
  %v2288 = vpop.f32.mrb[0].mxu0
  %v2289 = vadd.f32 %v2144, %v2288
  %v2290 = vpop.f32.mrb[0].mxu0
  %2291 = vmatprep.mubr.f32.mxu0 %v1810
  %2292 = vmatmul.mubr.f32.gmra.mrb[0].mxu0 %v1809
  %v2293 = vpop.f32.mrb[0].mxu0
  %v2294 = vadd.f32 %v2149, %v2293
  %v2295 = vpop.f32.mrb[0].mxu0
  %2296 = vmatprep.mubr.f32.mxu0 %v1819
  %2297 = vmatmul.mubr.f32.gmra.mrb[0].mxu0 %v1818
  %v2298 = vpop.f32.mrb[0].mxu0
  %v2299 = vadd.f32 %v2154, %v2298
  %v2300 = vpop.f32.mrb[0].mxu0
  %2301 = vmatprep.mubr.f32.mxu0 %v1828
  %2302 = vmatmul.mubr.f32.gmra.mrb[0].mxu0 %v1827
  %v2303 = vpop.f32.mrb[0].mxu0
  %v2304 = vadd.f32 %v2159, %v2303
  %v2305 = vpop.f32.mrb[0].mxu0
  %2306 = vmatprep.mubr.f32.mxu0 %v1837
  %2307 = vmatmul.mubr.f32.gmra.mrb[0].mxu0 %v1836
  %v2308 = vpop.f32.mrb[0].mxu0
  %v2309 = vadd.f32 %v2164, %v2308
  %v2310 = vpop.f32.mrb[0].mxu0
  %2311 = vmatprep.mubr.f32.mxu0 %v1846
  %2312 = vmatmul.mubr.f32.gmra.mrb[0].mxu0 %v1845
  %v2313 = vpop.f32.mrb[0].mxu0
  %v2314 = vadd.f32 %v2169, %v2313
  %v2315 = vpop.f32.mrb[0].mxu0
  %2316 = vmatprep.mubr.f32.mxu0 %v1855
  %2317 = vmatmul.mubr.f32.gmra.mrb[0].mxu0 %v1854
  %v2318 = vpop.f32.mrb[0].mxu0
  %v2319 = vadd.f32 %v2174, %v2318
  %v2320 = vpop.f32.mrb[0].mxu0
  %2321 = vmatprep.mubr.f32.mxu0 %v1864
  %2322 = vmatmul.mubr.f32.gmra.mrb[0].mxu0 %v1863
  %v2323 = vpop.f32.mrb[0].mxu0
  %v2324 = vadd.f32 %v2179, %v2323
  %v2325 = vpop.f32.mrb[0].mxu0
  %2326 = vmatprep.mubr.f32.mxu0 %v1873
  %2327 = vmatmul.mubr.f32.gmra.mrb[0].mxu0 %v1872
  %v2328 = vpop.f32.mrb[0].mxu0
  %v2329 = vadd.f32 %v2184, %v2328
  %v2330 = vpop.f32.mrb[0].mxu0
  %2331 = vmatprep.mubr.f32.mxu0 %v1882
  %2332 = vmatmul.mubr.f32.gmra.mrb[0].mxu0 %v1881
  %v2333 = vpop.f32.mrb[0].mxu0
  %v2334 = vadd.f32 %v2189, %v2333
  %v2335 = vpop.f32.mrb[0].mxu0
  %2336 = vmatprep.mubr.f32.mxu0 %v1891
  %2337 = vmatmul.mubr.f32.gmra.mrb[0].mxu0 %v1890
  %v2338 = vpop.f32.mrb[0].mxu0
  %v2339 = vadd.f32 %v2194, %v2338
  %v2340 = vpop.f32.mrb[0].mxu0
  %2341 = vmatprep.mubr.f32.mxu0 %v1900
  %2342 = vmatmul.mubr.f32.gmra.mrb[0].mxu0 %v1899
  %v2343 = vpop.f32.mrb[0].mxu0
  %v2344 = vadd.f32 %v2199, %v2343
  %v2345 = vpop.f32.mrb[0].mxu0
  %2346 = vmatprep.mubr.f32.mxu0 %v1909
  %2347 = vmatmul.mubr.f32.gmra.mrb[0].mxu0 %v1908
  %v2348 = vpop.f32.mrb[0].mxu0
  %v2349 = vadd.f32 %v2204, %v2348
  %v2350 = vpop.f32.mrb[0].mxu0
  %2351 = vmatprep.mubr.f32.mxu0 %v1918
  %2352 = vmatmul.mubr.f32.gmra.mrb[0].mxu0 %v1917
  %v2353 = vpop.f32.mrb[0].mxu0
  %v2354 = vadd.f32 %v2209, %v2353
  %v2355 = vpop.f32.mrb[0].mxu0
  %2356 = vdwg.mxu0
  %2357 = vmatprep.subr.mxu0 0.0
  %2358 = vmatpush1.msra.mxu0 %v1720
  %2359 = vmatprep.subr.mxu0 0.0
  %2360 = vmatpush1.msra.mxu0 %v1721
  %2361 = vmatprep.subr.mxu0 0.0
  %2362 = vmatpush1.msra.mxu0 %v1722
  %2363 = vmatprep.subr.mxu0 0.0
  %2364 = vmatpush1.msra.mxu0 %v1723
  %2365 = vmatprep.subr.mxu0 0.0
  %2366 = vmatpush1.msra.mxu0 %v1724
  %2367 = vmatprep.subr.mxu0 0.0
  %2368 = vmatpush1.msra.mxu0 %v1725
  %2369 = vmatprep.subr.mxu0 0.0
  %2370 = vmatpush1.msra.mxu0 %v1726
  %2371 = vmatprep.subr.mxu0 0.0
  %2372 = vmatpush1.msra.mxu0 %v1727
  %2373 = vmatprep.subr.mxu0 0.0
  %2374 = vmatpush1.msra.mxu0 %v1728
  %2375 = vmatprep.subr.mxu0 0.0
  %2376 = vmatpush1.msra.mxu0 %v1729
  %2377 = vmatprep.subr.mxu0 0.0
  %2378 = vmatpush1.msra.mxu0 %v1730
  %2379 = vmatprep.subr.mxu0 0.0
  %2380 = vmatpush1.msra.mxu0 %v1731
  %2381 = vmatprep.subr.mxu0 0.0
  %2382 = vmatpush1.msra.mxu0 %v1732
  %2383 = vmatprep.subr.mxu0 0.0
  %2384 = vmatpush1.msra.mxu0 %v1733
  %2385 = vmatprep.subr.mxu0 0.0
  %2386 = vmatpush1.msra.mxu0 %v1734
  %2387 = vmatprep.subr.mxu0 0.0
  %2388 = vmatpush1.msra.mxu0 %v1735
  %2389 = vmatprep.subr.mxu0 0.0
  %2390 = vmatpush1.msra.mxu0 %v1741
  %2391 = vmatprep.subr.mxu0 0.0
  %2392 = vmatpush1.msra.mxu0 %v1742
  %2393 = vmatprep.subr.mxu0 0.0
  %2394 = vmatpush1.msra.mxu0 %v1743
  %2395 = vmatprep.subr.mxu0 0.0
  %2396 = vmatpush1.msra.mxu0 %v1744
  %2397 = vmatprep.subr.mxu0 0.0
  %2398 = vmatpush1.msra.mxu0 %v1745
  %2399 = vmatprep.subr.mxu0 0.0
  %2400 = vmatpush1.msra.mxu0 %v1746
  %2401 = vmatprep.subr.mxu0 0.0
  %2402 = vmatpush1.msra.mxu0 %v1747
  %2403 = vmatprep.subr.mxu0 0.0
  %2404 = vmatpush1.msra.mxu0 %v1748
  %2405 = vmatprep.subr.mxu0 0.0
  %2406 = vmatpush1.msra.mxu0 %v1749
  %2407 = vmatprep.subr.mxu0 0.0
  %2408 = vmatpush1.msra.mxu0 %v1750
  %2409 = vmatprep.subr.mxu0 0.0
  %2410 = vmatpush1.msra.mxu0 %v1751
  %2411 = vmatprep.subr.mxu0 0.0
  %2412 = vmatpush1.msra.mxu0 %v1752
  %2413 = vmatprep.subr.mxu0 0.0
  %2414 = vmatpush1.msra.mxu0 %v1753
  %2415 = vmatprep.subr.mxu0 0.0
  %2416 = vmatpush1.msra.mxu0 %v1754
  %2417 = vmatprep.subr.mxu0 0.0
  %2418 = vmatpush1.msra.mxu0 %v1755
  %2419 = vmatprep.subr.mxu0 0.0
  %2420 = vmatpush1.msra.mxu0 %v1756
  %2421 = vmatprep.mubr.f32.mxu0 %v1785
  %2422 = vmatmul.mubr.f32.gmra.mrb[0].mxu0 %v1784
  %v2423 = vpop.f32.mrb[0].mxu0
  %v2424 = vadd.f32 %v2279, %v2423
  %v2425 = vpop.f32.mrb[0].mxu0
  %2426 = vmatprep.mubr.f32.mxu0 %v1794
  %2427 = vmatmul.mubr.f32.gmra.mrb[0].mxu0 %v1793
  %v2428 = vpop.f32.mrb[0].mxu0
  %v2429 = vadd.f32 %v2284, %v2428
  %v2430 = vpop.f32.mrb[0].mxu0
  %2431 = vmatprep.mubr.f32.mxu0 %v1803
  %2432 = vmatmul.mubr.f32.gmra.mrb[0].mxu0 %v1802
  %v2433 = vpop.f32.mrb[0].mxu0
  %v2434 = vadd.f32 %v2289, %v2433
  %v2435 = vpop.f32.mrb[0].mxu0
  %2436 = vmatprep.mubr.f32.mxu0 %v1812
  %2437 = vmatmul.mubr.f32.gmra.mrb[0].mxu0 %v1811
  %v2438 = vpop.f32.mrb[0].mxu0
  %v2439 = vadd.f32 %v2294, %v2438
  %v2440 = vpop.f32.mrb[0].mxu0
  %2441 = vmatprep.mubr.f32.mxu0 %v1821
  %2442 = vmatmul.mubr.f32.gmra.mrb[0].mxu0 %v1820
  %v2443 = vpop.f32.mrb[0].mxu0
  %v2444 = vadd.f32 %v2299, %v2443
  %v2445 = vpop.f32.mrb[0].mxu0
  %2446 = vmatprep.mubr.f32.mxu0 %v1830
  %2447 = vmatmul.mubr.f32.gmra.mrb[0].mxu0 %v1829
  %v2448 = vpop.f32.mrb[0].mxu0
  %v2449 = vadd.f32 %v2304, %v2448
  %v2450 = vpop.f32.mrb[0].mxu0
  %2451 = vmatprep.mubr.f32.mxu0 %v1839
  %2452 = vmatmul.mubr.f32.gmra.mrb[0].mxu0 %v1838
  %v2453 = vpop.f32.mrb[0].mxu0
  %v2454 = vadd.f32 %v2309, %v2453
  %v2455 = vpop.f32.mrb[0].mxu0
  %2456 = vmatprep.mubr.f32.mxu0 %v1848
  %2457 = vmatmul.mubr.f32.gmra.mrb[0].mxu0 %v1847
  %v2458 = vpop.f32.mrb[0].mxu0
  %v2459 = vadd.f32 %v2314, %v2458
  %v2460 = vpop.f32.mrb[0].mxu0
  %2461 = vmatprep.mubr.f32.mxu0 %v1857
  %2462 = vmatmul.mubr.f32.gmra.mrb[0].mxu0 %v1856
  %v2463 = vpop.f32.mrb[0].mxu0
  %v2464 = vadd.f32 %v2319, %v2463
  %v2465 = vpop.f32.mrb[0].mxu0
  %2466 = vmatprep.mubr.f32.mxu0 %v1866
  %2467 = vmatmul.mubr.f32.gmra.mrb[0].mxu0 %v1865
  %v2468 = vpop.f32.mrb[0].mxu0
  %v2469 = vadd.f32 %v2324, %v2468
  %v2470 = vpop.f32.mrb[0].mxu0
  %2471 = vmatprep.mubr.f32.mxu0 %v1875
  %2472 = vmatmul.mubr.f32.gmra.mrb[0].mxu0 %v1874
  %v2473 = vpop.f32.mrb[0].mxu0
  %v2474 = vadd.f32 %v2329, %v2473
  %v2475 = vpop.f32.mrb[0].mxu0
  %2476 = vmatprep.mubr.f32.mxu0 %v1884
  %2477 = vmatmul.mubr.f32.gmra.mrb[0].mxu0 %v1883
  %v2478 = vpop.f32.mrb[0].mxu0
  %v2479 = vadd.f32 %v2334, %v2478
  %v2480 = vpop.f32.mrb[0].mxu0
  %2481 = vmatprep.mubr.f32.mxu0 %v1893
  %2482 = vmatmul.mubr.f32.gmra.mrb[0].mxu0 %v1892
  %v2483 = vpop.f32.mrb[0].mxu0
  %v2484 = vadd.f32 %v2339, %v2483
  %v2485 = vpop.f32.mrb[0].mxu0
  %2486 = vmatprep.mubr.f32.mxu0 %v1902
  %2487 = vmatmul.mubr.f32.gmra.mrb[0].mxu0 %v1901
  %v2488 = vpop.f32.mrb[0].mxu0
  %v2489 = vadd.f32 %v2344, %v2488
  %v2490 = vpop.f32.mrb[0].mxu0
  %2491 = vmatprep.mubr.f32.mxu0 %v1911
  %2492 = vmatmul.mubr.f32.gmra.mrb[0].mxu0 %v1910
  %v2493 = vpop.f32.mrb[0].mxu0
  %v2494 = vadd.f32 %v2349, %v2493
  %v2495 = vpop.f32.mrb[0].mxu0
  %2496 = vmatprep.mubr.f32.mxu0 %v1920
  %2497 = vmatmul.mubr.f32.gmra.mrb[0].mxu0 %v1919
  %v2498 = vpop.f32.mrb[0].mxu0
  %v2499 = vadd.f32 %v2354, %v2498
  %v2500 = vpop.f32.mrb[0].mxu0
  %2501 = vdwg.mxu0
  %2502 = vmatprep.subr.mxu0 0.0
  %2503 = vmatpush1.msra.mxu0 %v1762
  %2504 = vmatprep.subr.mxu0 0.0
  %2505 = vmatpush1.msra.mxu0 %v1763
  %2506 = vmatprep.subr.mxu0 0.0
  %2507 = vmatpush1.msra.mxu0 %v1764
  %2508 = vmatprep.subr.mxu0 0.0
  %2509 = vmatpush1.msra.mxu0 %v1765
  %2510 = vmatprep.subr.mxu0 0.0
  %2511 = vmatpush1.msra.mxu0 %v1766
  %2512 = vmatprep.subr.mxu0 0.0
  %2513 = vmatpush1.msra.mxu0 %v1767
  %2514 = vmatprep.subr.mxu0 0.0
  %2515 = vmatpush1.msra.mxu0 %v1768
  %2516 = vmatprep.subr.mxu0 0.0
  %2517 = vmatpush1.msra.mxu0 %v1769
  %2518 = vmatprep.subr.mxu0 0.0
  %2519 = vmatpush1.msra.mxu0 %v1770
  %2520 = vmatprep.subr.mxu0 0.0
  %2521 = vmatpush1.msra.mxu0 %v1771
  %2522 = vmatprep.subr.mxu0 0.0
  %2523 = vmatpush1.msra.mxu0 %v1772
  %2524 = vmatprep.subr.mxu0 0.0
  %2525 = vmatpush1.msra.mxu0 %v1773
  %2526 = vmatprep.subr.mxu0 0.0
  %2527 = vmatpush1.msra.mxu0 %v1774
  %2528 = vmatprep.subr.mxu0 0.0
  %2529 = vmatpush1.msra.mxu0 %v1775
  %2530 = vmatprep.subr.mxu0 0.0
  %2531 = vmatpush1.msra.mxu0 %v1776
  %2532 = vmatprep.subr.mxu0 0.0
  %2533 = vmatpush1.msra.mxu0 %v1777
  %2534 = vmatprep.subr.mxu0 0.0
  %2535 = vmatpush1.msra.mxu0 0.0
  %2536 = vmatprep.subr.mxu0 0.0
  %2537 = vmatpush1.msra.mxu0 0.0
  %2538 = vmatprep.subr.mxu0 0.0
  %2539 = vmatpush1.msra.mxu0 0.0
  %2540 = vmatprep.subr.mxu0 0.0
  %2541 = vmatpush1.msra.mxu0 0.0
  %2542 = vmatprep.subr.mxu0 0.0
  %2543 = vmatpush1.msra.mxu0 0.0
  %2544 = vmatprep.subr.mxu0 0.0
  %2545 = vmatpush1.msra.mxu0 0.0
  %2546 = vmatprep.subr.mxu0 0.0
  %2547 = vmatpush1.msra.mxu0 0.0
  %2548 = vmatprep.subr.mxu0 0.0
  %2549 = vmatpush1.msra.mxu0 0.0
  %2550 = vmatprep.subr.mxu0 0.0
  %2551 = vmatpush1.msra.mxu0 0.0
  %2552 = vmatprep.subr.mxu0 0.0
  %2553 = vmatpush1.msra.mxu0 0.0
  %2554 = vmatprep.subr.mxu0 0.0
  %2555 = vmatpush1.msra.mxu0 0.0
  %2556 = vmatprep.subr.mxu0 0.0
  %2557 = vmatpush1.msra.mxu0 0.0
  %2558 = vmatprep.subr.mxu0 0.0
  %2559 = vmatpush1.msra.mxu0 0.0
  %2560 = vmatprep.subr.mxu0 0.0
  %2561 = vmatpush1.msra.mxu0 0.0
  %2562 = vmatprep.subr.mxu0 0.0
  %2563 = vmatpush1.msra.mxu0 0.0
  %2564 = vmatprep.subr.mxu0 0.0
  %2565 = vmatpush1.msra.mxu0 0.0
  %2566 = vmatprep.mubr.f32.mxu0 0.0
  %2567 = vmatmul.mubr.f32.gmra.mrb[0].mxu0 %v1786
  %v2568 = vpop.f32.mrb[0].mxu0
  %v2569 = vadd.f32 %v2424, %v2568
  %v2570 = vpop.f32.mrb[0].mxu0
  %2571 = vmatprep.mubr.f32.mxu0 0.0
  %2572 = vmatmul.mubr.f32.gmra.mrb[0].mxu0 %v1795
  %v2573 = vpop.f32.mrb[0].mxu0
  %v2574 = vadd.f32 %v2429, %v2573
  %v2575 = vpop.f32.mrb[0].mxu0
  %2576 = vmatprep.mubr.f32.mxu0 0.0
  %2577 = vmatmul.mubr.f32.gmra.mrb[0].mxu0 %v1804
  %v2578 = vpop.f32.mrb[0].mxu0
  %v2579 = vadd.f32 %v2434, %v2578
  %v2580 = vpop.f32.mrb[0].mxu0
  %2581 = vmatprep.mubr.f32.mxu0 0.0
  %2582 = vmatmul.mubr.f32.gmra.mrb[0].mxu0 %v1813
  %v2583 = vpop.f32.mrb[0].mxu0
  %v2584 = vadd.f32 %v2439, %v2583
  %v2585 = vpop.f32.mrb[0].mxu0
  %2586 = vmatprep.mubr.f32.mxu0 0.0
  %2587 = vmatmul.mubr.f32.gmra.mrb[0].mxu0 %v1822
  %v2588 = vpop.f32.mrb[0].mxu0
  %v2589 = vadd.f32 %v2444, %v2588
  %v2590 = vpop.f32.mrb[0].mxu0
  %2591 = vmatprep.mubr.f32.mxu0 0.0
  %2592 = vmatmul.mubr.f32.gmra.mrb[0].mxu0 %v1831
  %v2593 = vpop.f32.mrb[0].mxu0
  %v2594 = vadd.f32 %v2449, %v2593
  %v2595 = vpop.f32.mrb[0].mxu0
  %2596 = vmatprep.mubr.f32.mxu0 0.0
  %2597 = vmatmul.mubr.f32.gmra.mrb[0].mxu0 %v1840
  %v2598 = vpop.f32.mrb[0].mxu0
  %v2599 = vadd.f32 %v2454, %v2598
  %v2600 = vpop.f32.mrb[0].mxu0
  %2601 = vmatprep.mubr.f32.mxu0 0.0
  %2602 = vmatmul.mubr.f32.gmra.mrb[0].mxu0 %v1849
  %v2603 = vpop.f32.mrb[0].mxu0
  %v2604 = vadd.f32 %v2459, %v2603
  %v2605 = vpop.f32.mrb[0].mxu0
  %2606 = vmatprep.mubr.f32.mxu0 0.0
  %2607 = vmatmul.mubr.f32.gmra.mrb[0].mxu0 %v1858
  %v2608 = vpop.f32.mrb[0].mxu0
  %v2609 = vadd.f32 %v2464, %v2608
  %v2610 = vpop.f32.mrb[0].mxu0
  %2611 = vmatprep.mubr.f32.mxu0 0.0
  %2612 = vmatmul.mubr.f32.gmra.mrb[0].mxu0 %v1867
  %v2613 = vpop.f32.mrb[0].mxu0
  %v2614 = vadd.f32 %v2469, %v2613
  %v2615 = vpop.f32.mrb[0].mxu0
  %2616 = vmatprep.mubr.f32.mxu0 0.0
  %2617 = vmatmul.mubr.f32.gmra.mrb[0].mxu0 %v1876
  %v2618 = vpop.f32.mrb[0].mxu0
  %v2619 = vadd.f32 %v2474, %v2618
  %v2620 = vpop.f32.mrb[0].mxu0
  %2621 = vmatprep.mubr.f32.mxu0 0.0
  %2622 = vmatmul.mubr.f32.gmra.mrb[0].mxu0 %v1885
  %v2623 = vpop.f32.mrb[0].mxu0
  %v2624 = vadd.f32 %v2479, %v2623
  %v2625 = vpop.f32.mrb[0].mxu0
  %2626 = vmatprep.mubr.f32.mxu0 0.0
  %2627 = vmatmul.mubr.f32.gmra.mrb[0].mxu0 %v1894
  %v2628 = vpop.f32.mrb[0].mxu0
  %v2629 = vadd.f32 %v2484, %v2628
  %v2630 = vpop.f32.mrb[0].mxu0
  %2631 = vmatprep.mubr.f32.mxu0 0.0
  %2632 = vmatmul.mubr.f32.gmra.mrb[0].mxu0 %v1903
  %v2633 = vpop.f32.mrb[0].mxu0
  %v2634 = vadd.f32 %v2489, %v2633
  %v2635 = vpop.f32.mrb[0].mxu0
  %2636 = vmatprep.mubr.f32.mxu0 0.0
  %2637 = vmatmul.mubr.f32.gmra.mrb[0].mxu0 %v1912
  %v2638 = vpop.f32.mrb[0].mxu0
  %v2639 = vadd.f32 %v2494, %v2638
  %v2640 = vpop.f32.mrb[0].mxu0
  %2641 = vmatprep.mubr.f32.mxu0 0.0
  %2642 = vmatmul.mubr.f32.gmra.mrb[0].mxu0 %v1921
  %v2643 = vpop.f32.mrb[0].mxu0
  %v2644 = vadd.f32 %v2499, %v2643
  %v2645 = vpop.f32.mrb[0].mxu0
  %2646 = vdwg.mxu0
  %v2647 = vadd.f32 %v1112, %v2569
  %v2648 = vadd.f32 %v1113, %v2574
  %v2649 = vadd.f32 %v1114, %v2579
  %v2650 = vadd.f32 %v1115, %v2584
  %v2651 = vadd.f32 %v1116, %v2589
  %v2652 = vadd.f32 %v1117, %v2594
  %v2653 = vadd.f32 %v1118, %v2599
  %v2654 = vadd.f32 %v1119, %v2604
  %v2655 = vadd.f32 %v1581, %v2609
  %v2656 = vadd.f32 %v1582, %v2614
  %v2657 = vadd.f32 %v1583, %v2619
  %v2658 = vadd.f32 %v1584, %v2624
  %v2659 = vadd.f32 %v1585, %v2629
  %v2660 = vadd.f32 %v1586, %v2634
  %v2661 = vadd.f32 %v1587, %v2639
  %v2662 = vadd.f32 %v1588, %v2644
  %v2663 = vld [vmem:[%s7 + $0x9] sm:$0x1]
  %v2664 = vlaneseq
  %v2665 = vshrl.u32 %v2664, 7
  %v2666 = vsub.s32 0, %v2665
  %v2667 = vrot.slane %v2663, %v2666
  %v2668 = vadd.f32 %v2647, %v2667
  %v2669 = vadd.f32 %v2648, %v2667
  %v2670 = vadd.f32 %v2649, %v2667
  %v2671 = vadd.f32 %v2650, %v2667
  %v2672 = vadd.f32 %v2651, %v2667
  %v2673 = vadd.f32 %v2652, %v2667
  %v2674 = vadd.f32 %v2653, %v2667
  %v2675 = vadd.f32 %v2654, %v2667
  %v2676 = vadd.f32 %v2655, %v2667
  %v2677 = vadd.f32 %v2656, %v2667
  %v2678 = vadd.f32 %v2657, %v2667
  %v2679 = vadd.f32 %v2658, %v2667
  %v2680 = vadd.f32 %v2659, %v2667
  %v2681 = vadd.f32 %v2660, %v2667
  %v2682 = vadd.f32 %v2661, %v2667
  %v2683 = vadd.f32 %v2662, %v2667
  %2684 = vst.msk [vmem:[%s8] sm:$0xff] %vm56, %v2668
  %2685 = vst.msk [vmem:[%s8 + $0x8] sm:$0xff] %vm56, %v2669
  %2686 = vst.msk [vmem:[%s8 + $0x10] sm:$0xff] %vm56, %v2670
  %2687 = vst.msk [vmem:[%s8 + $0x18] sm:$0xff] %vm56, %v2671
  %2688 = vst.msk [vmem:[%s8 + $0x20] sm:$0xff] %vm56, %v2672
  %2689 = vst.msk [vmem:[%s8 + $0x28] sm:$0xff] %vm56, %v2673
  %2690 = vst.msk [vmem:[%s8 + $0x30] sm:$0xff] %vm56, %v2674
  %2691 = vst.msk [vmem:[%s8 + $0x38] sm:$0xff] %vm56, %v2675
  %2692 = vst.msk [vmem:[%s8 + $0x40] sm:$0xff] %vm56, %v2676
  %2693 = vst.msk [vmem:[%s8 + $0x48] sm:$0xff] %vm56, %v2677
  %2694 = vst.msk [vmem:[%s8 + $0x50] sm:$0xff] %vm56, %v2678
  %2695 = vst.msk [vmem:[%s8 + $0x58] sm:$0xff] %vm56, %v2679
  %2696 = vst.msk [vmem:[%s8 + $0x60] sm:$0xff] %vm56, %v2680
  %2697 = vst.msk [vmem:[%s8 + $0x68] sm:$0xff] %vm56, %v2681
  %2698 = vst.msk [vmem:[%s8 + $0x70] sm:$0xff] %vm56, %v2682
  %2699 = vst.msk [vmem:[%s8 + $0x78] sm:$0xff] %vm56, %v2683
  // Predicated region
  $region34: #{_linear_attention_impl.1} parent=0 // pred_check
    _
  $region35: #{_linear_attention_impl.1} parent=0 // pred_check_branch
    %2701 = sbr.rel (0) target = $region37
  $region36: #{_linear_attention_impl.1} parent=0 // pred_region
    _
  $region37: #{_linear_attention_impl.1} parent=0 // pred_fallthru
    _
  // Predicated region
  $region38: #{_linear_attention_impl.1} parent=0 // pred_check
    _
  $region39: #{_linear_attention_impl.1} parent=0 // pred_check_branch
    %2703 = sbr.rel (0) target = $region41
  $region40: #{_linear_attention_impl.1} parent=0 // pred_region
    _
  $region41: #{_linear_attention_impl.1} parent=0 // pred_fallthru
    _

</llo_original>
